<compile_context>
chip_gen: v7x
topology: tpu7x:2x2x1
jax: 0.10.0
libtpu: 0.0.40
codegen_flags: <defaults>
</compile_context>

<pallas_src>
import jax
import jax.numpy as jnp
from jax import lax
from jax.experimental import pallas as pl
from jax.experimental.pallas import tpu as pltpu

EPS = 1e-5   # nn.BatchNorm3d default eps
TM = 8       # samples packed per matmul: TM*C1 = 128 MXU output rows


def _make_kernel(D, H, W, C0, C1, tm, groups):
    HW = H * W
    V = D * HW                      # flattened voxels per sample (lane axis)
    CT = C0 * tm                    # packed conv_0 rows: cin*tm + t (sublanes)
    shifts = tuple(kd * HW + kh * W + kw
                   for kd in range(2) for kh in range(2) for kw in range(2))

    def kernel(x_ref, w0_ref, b0_ref, w1_ref, b1_ref, pw_ref, o_ref, at_ref):
        # ---- conv_0 (1x1x1, BN folded) + ReLU, then lane-rotate im2col ------
        for gr in range(groups):
            xg = x_ref[gr * tm:(gr + 1) * tm, :]                  # (tm, V) f32
            xrep = jnp.concatenate([xg] * C0, axis=0)             # (CT, V), row cin*tm+t
            a0 = jnp.maximum(w0_ref[...] * xrep + b0_ref[...], 0.0)
            a0 = a0.astype(jnp.bfloat16)                          # bf16 MXU operand
            for o, s in enumerate(shifts):
                if s == 0:
                    blk = a0
                else:
                    # lane-rotate by s: column p <- a0[:, p + s]; the wrapped
                    # tail only reaches columns p >= V - 73 >= 439 (masked).
                    blk = jnp.concatenate([a0[:, s:], a0[:, :s]], axis=1)
                at_ref[o * CT:(o + 1) * CT, gr * V:(gr + 1) * V] = blk

        # ---- conv_1 (2x2x2 VALID, BN folded): ONE bf16 MXU matmul -----------
        # (tm*C1, 8*CT) @ (8*CT, groups*V) -> positions on the lane/N axis.
        z = jnp.dot(w1_ref[...], at_ref[...], preferred_element_type=jnp.float32)
        z = jnp.maximum(z + b1_ref[...], 0.0)                     # (tm*C1, groups*V) f32

        # ---- AdaptiveAvgPool3d((1,1,1)): masked mean (VPU mul + XLU reduce) --
        cols = []
        for gr in range(groups):
            zg = z[:, gr * V:(gr + 1) * V] * pw_ref[...]
            cols.append(jnp.sum(zg, axis=1, keepdims=True))       # (tm*C1, 1)
        o_ref[...] = cols[0] if groups == 1 else jnp.concatenate(cols, axis=1)

    return kernel, V


def conv_embedding(x, params, tm=TM):
    (w0, b0, g0, be0, rm0, rv0, w1, b1, g1, be1, rm1, rv1) = params
    B, N, D, H, W = x.shape
    assert D >= 2 and H >= 2 and W >= 2
    C0 = w0.shape[0]
    C1 = w1.shape[0]
    M = B * N

    # Sample groups per grid step; keep the grid length >= 2 so both v7x
    # TensorCores get work under dimension_semantics=("parallel",).
    groups = 1
    for cand in (4, 2):
        if M >= 2 * cand * tm:
            groups = cand
            break

    kernel, V = _make_kernel(D, H, W, C0, C1, tm, groups)
    CT = C0 * tm
    step = groups * tm
    G = max(1, -(-M // step))
    Mp = G * step

    x2d = x.reshape(M, V).astype(jnp.float32)
    if Mp != M:
        x2d = jnp.pad(x2d, ((0, Mp - M), (0, 0)))

    # ---- fold eval-mode BatchNorm into the conv weights / biases ----
    s0 = g0 / jnp.sqrt(rv0 + EPS)
    w0f = w0.reshape(C0) * s0
    b0f = b0 * s0 + (be0 - rm0 * s0)
    s1 = g1 / jnp.sqrt(rv1 + EPS)
    w1f = jnp.transpose(w1, (2, 3, 4, 1, 0)).reshape(8, C0, C1) * s1[None, None, :]
    b1f = b1 * s1 + (be1 - rm1 * s1)

    # conv_0 per-row scale/bias (row = cin*tm + t)
    w0col = jnp.repeat(w0f, tm).reshape(CT, 1).astype(jnp.float32)
    b0col = jnp.repeat(b0f, tm).reshape(CT, 1).astype(jnp.float32)

    # conv_1 weight, transposed orientation, block-diagonal over the tm packed
    # samples: W1T[t*C1+cout, o*CT + cin*tm + t'] = w1f[o,cin,cout] * (t==t')
    eye = jnp.eye(tm, dtype=jnp.float32)
    w1T = (jnp.transpose(w1f, (2, 0, 1))[None, :, :, :, None] *
           eye[:, None, None, None, :]).reshape(tm * C1, 8 * CT)
    w1T = w1T.astype(jnp.bfloat16)
    b1col = jnp.tile(b1f, tm).reshape(tm * C1, 1).astype(jnp.float32)

    # pooling weights: 1/n_valid on valid 2x2x2-VALID output positions, else 0
    # (also zeroes the pad / wrapped-rotation columns p >= (D-1)(H-1)(W-1) ...).
    n_valid = (D - 1) * (H - 1) * (W - 1)
    p = jnp.arange(V)
    valid = ((p // (H * W)) <= D - 2) & (((p // W) % H) <= H - 2) & ((p % W) <= W - 2)
    pw = (valid.astype(jnp.float32) / n_valid).reshape(1, V)

    out = pl.pallas_call(
        kernel,
        out_shape=jax.ShapeDtypeStruct((G, tm * C1, groups), jnp.float32),
        grid=(G,),
        in_specs=[
            pl.BlockSpec((step, V), lambda g: (g, 0)),           # lane-dense input
            pl.BlockSpec((CT, 1), lambda g: (0, 0)),
            pl.BlockSpec((CT, 1), lambda g: (0, 0)),
            pl.BlockSpec((tm * C1, 8 * CT), lambda g: (0, 0)),   # bf16 weight
            pl.BlockSpec((tm * C1, 1), lambda g: (0, 0)),
            pl.BlockSpec((1, V), lambda g: (0, 0)),
        ],
        out_specs=pl.BlockSpec((None, tm * C1, groups), lambda g: (g, 0, 0)),
        scratch_shapes=[pltpu.VMEM((8 * CT, groups * V), jnp.bfloat16)],  # A^T im2col
        compiler_params=pltpu.CompilerParams(
            dimension_semantics=("parallel",)),
    )(x2d, w0col, b0col, w1T, b1col, pw)

    # (G, tm*C1, groups) -> (Mp, C1): sample index = g*groups*tm + gr*tm + t
    out = out.reshape(G, tm, C1, groups).transpose(0, 3, 1, 2).reshape(Mp, C1)[:M]
    return out.reshape(B, N, C1)


def reference(x, params):
    """Pure-JAX f32 reference mirroring the PyTorch module (eval-mode BN)."""
    (w0, b0, g0, be0, rm0, rv0, w1, b1, g1, be1, rm1, rv1) = params
    B, N, D, H, W = x.shape
    v = x.reshape(B * N, 1, D, H, W)
    dn = ("NCDHW", "OIDHW", "NCDHW")
    sh = (1, -1, 1, 1, 1)

    def bn(y, g, be, rm, rv):
        return (y - rm.reshape(sh)) / jnp.sqrt(rv.reshape(sh) + EPS) \
               * g.reshape(sh) + be.reshape(sh)

    y = lax.conv_general_dilated(v, w0, (1, 1, 1), "VALID", dimension_numbers=dn)
    y = jnp.maximum(bn(y + b0.reshape(sh), g0, be0, rm0, rv0), 0.0)
    y = lax.conv_general_dilated(y, w1, (1, 1, 1), "VALID", dimension_numbers=dn)
    y = jnp.maximum(bn(y + b1.reshape(sh), g1, be1, rm1, rv1), 0.0)
    y = jnp.mean(y, axis=(2, 3, 4))
    return y.reshape(B, N, -1)


if __name__ == "__main__":
    B, N, D, H, W = 2, 8, 8, 8, 8      # M = B*N = 16 -> grid of 2 steps (groups=1)
    feature_depth = [8, 16]            # kernels = [1, 2]  (paddings 0, 0)
    C0, C1 = feature_depth

    keys = jax.random.split(jax.random.PRNGKey(0), 16)
    x = jax.random.normal(keys[0], (B, N, D, H, W), jnp.float32)

    # deterministic synthetic parameters (module __init__ shapes)
    w0 = 0.2 * jax.random.normal(keys[1], (C0, 1, 1, 1, 1), jnp.float32)
    b0 = 0.1 * jax.random.normal(keys[2], (C0,), jnp.float32)
    g0 = 1.0 + 0.1 * jax.random.normal(keys[3], (C0,), jnp.float32)
    be0 = 0.1 * jax.random.normal(keys[4], (C0,), jnp.float32)
    rm0 = 0.1 * jax.random.normal(keys[5], (C0,), jnp.float32)
    rv0 = jax.random.uniform(keys[6], (C0,), jnp.float32, 0.5, 1.5)

    w1 = 0.2 * jax.random.normal(keys[7], (C1, C0, 2, 2, 2), jnp.float32)
    b1 = 0.1 * jax.random.normal(keys[8], (C1,), jnp.float32)
    g1 = 1.0 + 0.1 * jax.random.normal(keys[9], (C1,), jnp.float32)
    be1 = 0.1 * jax.random.normal(keys[10], (C1,), jnp.float32)
    rm1 = 0.1 * jax.random.normal(keys[11], (C1,), jnp.float32)
    rv1 = jax.random.uniform(keys[12], (C1,), jnp.float32, 0.5, 1.5)

    params = (w0, b0, g0, be0, rm0, rv0, w1, b1, g1, be1, rm1, rv1)

    out = conv_embedding(x, params)
    out = jax.block_until_ready(out)
    ref = reference(x, params)

    assert out.shape == (B, N, C1), out.shape
    # bf16 MXU operands with f32 accumulation: expected max abs error ~1e-3.
    err = float(jnp.max(jnp.abs(out - ref)))
    assert jnp.allclose(out, ref, rtol=1e-2, atol=5e-3), err
    print("KERNEL_OK")
</pallas_src>

<mosaic_0001>
module attributes {stable_mosaic.version = 11 : i64} {
  func.func @kernel(%arg0: i32, %arg1: memref<8x512xf32, #tpu.memory_space<vmem>>, %arg2: memref<64x1xf32, #tpu.memory_space<vmem>>, %arg3: memref<64x1xf32, #tpu.memory_space<vmem>>, %arg4: memref<128x512xbf16, #tpu.memory_space<vmem>>, %arg5: memref<128x1xf32, #tpu.memory_space<vmem>>, %arg6: memref<1x512xf32, #tpu.memory_space<vmem>>, %arg7: memref<1x128x1xf32, #tpu.memory_space<vmem>>, %arg8: memref<512x512xbf16, #tpu.memory_space<vmem>>) attributes {dimension_semantics = [#tpu.dimension_semantics<parallel>], iteration_bounds = array<i64: 2>, scalar_prefetch = 0 : i64, scratch_operands = 1 : i64, tpu.core_type = #tpu.core_type<tc>, window_params = [{transform_indices = @transform_0, window_bounds = array<i64: 8, 512>}, {pipeline_mode = #tpu.pipeline_mode<synchronous>, transform_indices = @transform_1, window_bounds = array<i64: 64, 1>}, {pipeline_mode = #tpu.pipeline_mode<synchronous>, transform_indices = @transform_2, window_bounds = array<i64: 64, 1>}, {pipeline_mode = #tpu.pipeline_mode<synchronous>, transform_indices = @transform_3, window_bounds = array<i64: 128, 512>}, {pipeline_mode = #tpu.pipeline_mode<synchronous>, transform_indices = @transform_4, window_bounds = array<i64: 128, 1>}, {pipeline_mode = #tpu.pipeline_mode<synchronous>, transform_indices = @transform_5, window_bounds = array<i64: 1, 512>}, {transform_indices = @transform_6, window_bounds = array<i64: 1, 128, 1>}]} {
    %c0 = arith.constant 0 : index
    %c0_0 = arith.constant 0 : index
    %0 = vector.load %arg1[%c0, %c0_0] : memref<8x512xf32, #tpu.memory_space<vmem>>, vector<8x512xf32>
    %1 = tpu.concatenate %0, %0, %0, %0, %0, %0, %0, %0 in 0 : vector<8x512xf32>, vector<8x512xf32>, vector<8x512xf32>, vector<8x512xf32>, vector<8x512xf32>, vector<8x512xf32>, vector<8x512xf32>, vector<8x512xf32> -> vector<64x512xf32>
    %c0_1 = arith.constant 0 : index
    %c0_2 = arith.constant 0 : index
    %2 = vector.load %arg2[%c0_1, %c0_2] : memref<64x1xf32, #tpu.memory_space<vmem>>, vector<64x1xf32>
    %3 = vector.broadcast %2 : vector<64x1xf32> to vector<64x512xf32>
    %4 = arith.mulf %3, %1 : vector<64x512xf32>
    %c0_3 = arith.constant 0 : index
    %c0_4 = arith.constant 0 : index
    %5 = vector.load %arg3[%c0_3, %c0_4] : memref<64x1xf32, #tpu.memory_space<vmem>>, vector<64x1xf32>
    %6 = vector.broadcast %5 : vector<64x1xf32> to vector<64x512xf32>
    %7 = arith.addf %4, %6 : vector<64x512xf32>
    %cst = arith.constant 0.000000e+00 : f32
    %8 = vector.broadcast %cst : f32 to vector<64x512xf32>
    %9 = arith.maximumf %7, %8 : vector<64x512xf32>
    %10 = arith.truncf %9 : vector<64x512xf32> to vector<64x512xbf16>
    %c0_5 = arith.constant 0 : index
    %c0_6 = arith.constant 0 : index
    %11 = vector.load %arg8[%c0_5, %c0_6] : memref<512x512xbf16, #tpu.memory_space<vmem>>, vector<64x512xbf16>
    tpu.vector_store %arg8[%c0_5, %c0_6], %10 {strides = array<i32>} : memref<512x512xbf16, #tpu.memory_space<vmem>>, vector<64x512xbf16>,
    %12 = vector.extract_strided_slice %10 {offsets = [0, 1], sizes = [64, 511], strides = [1, 1]} : vector<64x512xbf16> to vector<64x511xbf16>
    %13 = vector.extract_strided_slice %10 {offsets = [0, 0], sizes = [64, 1], strides = [1, 1]} : vector<64x512xbf16> to vector<64x1xbf16>
    %14 = tpu.concatenate %12, %13 in 1 : vector<64x511xbf16>, vector<64x1xbf16> -> vector<64x512xbf16>
    %c64 = arith.constant 64 : index
    %c0_7 = arith.constant 0 : index
    %15 = vector.load %arg8[%c64, %c0_7] : memref<512x512xbf16, #tpu.memory_space<vmem>>, vector<64x512xbf16>
    tpu.vector_store %arg8[%c64, %c0_7], %14 {strides = array<i32>} : memref<512x512xbf16, #tpu.memory_space<vmem>>, vector<64x512xbf16>,
    %16 = vector.extract_strided_slice %10 {offsets = [0, 8], sizes = [64, 504], strides = [1, 1]} : vector<64x512xbf16> to vector<64x504xbf16>
    %17 = vector.extract_strided_slice %10 {offsets = [0, 0], sizes = [64, 8], strides = [1, 1]} : vector<64x512xbf16> to vector<64x8xbf16>
    %18 = tpu.concatenate %16, %17 in 1 : vector<64x504xbf16>, vector<64x8xbf16> -> vector<64x512xbf16>
    %c128 = arith.constant 128 : index
    %c0_8 = arith.constant 0 : index
    %19 = vector.load %arg8[%c128, %c0_8] : memref<512x512xbf16, #tpu.memory_space<vmem>>, vector<64x512xbf16>
    tpu.vector_store %arg8[%c128, %c0_8], %18 {strides = array<i32>} : memref<512x512xbf16, #tpu.memory_space<vmem>>, vector<64x512xbf16>,
    %20 = vector.extract_strided_slice %10 {offsets = [0, 9], sizes = [64, 503], strides = [1, 1]} : vector<64x512xbf16> to vector<64x503xbf16>
    %21 = vector.extract_strided_slice %10 {offsets = [0, 0], sizes = [64, 9], strides = [1, 1]} : vector<64x512xbf16> to vector<64x9xbf16>
    %22 = tpu.concatenate %20, %21 in 1 : vector<64x503xbf16>, vector<64x9xbf16> -> vector<64x512xbf16>
    %c192 = arith.constant 192 : index
    %c0_9 = arith.constant 0 : index
    %23 = vector.load %arg8[%c192, %c0_9] : memref<512x512xbf16, #tpu.memory_space<vmem>>, vector<64x512xbf16>
    tpu.vector_store %arg8[%c192, %c0_9], %22 {strides = array<i32>} : memref<512x512xbf16, #tpu.memory_space<vmem>>, vector<64x512xbf16>,
    %24 = vector.extract_strided_slice %10 {offsets = [0, 64], sizes = [64, 448], strides = [1, 1]} : vector<64x512xbf16> to vector<64x448xbf16>
    %25 = vector.extract_strided_slice %10 {offsets = [0, 0], sizes = [64, 64], strides = [1, 1]} : vector<64x512xbf16> to vector<64x64xbf16>
    %26 = tpu.concatenate %24, %25 in 1 : vector<64x448xbf16>, vector<64x64xbf16> -> vector<64x512xbf16>
    %c256 = arith.constant 256 : index
    %c0_10 = arith.constant 0 : index
    %27 = vector.load %arg8[%c256, %c0_10] : memref<512x512xbf16, #tpu.memory_space<vmem>>, vector<64x512xbf16>
    tpu.vector_store %arg8[%c256, %c0_10], %26 {strides = array<i32>} : memref<512x512xbf16, #tpu.memory_space<vmem>>, vector<64x512xbf16>,
    %28 = vector.extract_strided_slice %10 {offsets = [0, 65], sizes = [64, 447], strides = [1, 1]} : vector<64x512xbf16> to vector<64x447xbf16>
    %29 = vector.extract_strided_slice %10 {offsets = [0, 0], sizes = [64, 65], strides = [1, 1]} : vector<64x512xbf16> to vector<64x65xbf16>
    %30 = tpu.concatenate %28, %29 in 1 : vector<64x447xbf16>, vector<64x65xbf16> -> vector<64x512xbf16>
    %c320 = arith.constant 320 : index
    %c0_11 = arith.constant 0 : index
    %31 = vector.load %arg8[%c320, %c0_11] : memref<512x512xbf16, #tpu.memory_space<vmem>>, vector<64x512xbf16>
    tpu.vector_store %arg8[%c320, %c0_11], %30 {strides = array<i32>} : memref<512x512xbf16, #tpu.memory_space<vmem>>, vector<64x512xbf16>,
    %32 = vector.extract_strided_slice %10 {offsets = [0, 72], sizes = [64, 440], strides = [1, 1]} : vector<64x512xbf16> to vector<64x440xbf16>
    %33 = vector.extract_strided_slice %10 {offsets = [0, 0], sizes = [64, 72], strides = [1, 1]} : vector<64x512xbf16> to vector<64x72xbf16>
    %34 = tpu.concatenate %32, %33 in 1 : vector<64x440xbf16>, vector<64x72xbf16> -> vector<64x512xbf16>
    %c384 = arith.constant 384 : index
    %c0_12 = arith.constant 0 : index
    %35 = vector.load %arg8[%c384, %c0_12] : memref<512x512xbf16, #tpu.memory_space<vmem>>, vector<64x512xbf16>
    tpu.vector_store %arg8[%c384, %c0_12], %34 {strides = array<i32>} : memref<512x512xbf16, #tpu.memory_space<vmem>>, vector<64x512xbf16>,
    %36 = vector.extract_strided_slice %10 {offsets = [0, 73], sizes = [64, 439], strides = [1, 1]} : vector<64x512xbf16> to vector<64x439xbf16>
    %37 = vector.extract_strided_slice %10 {offsets = [0, 0], sizes = [64, 73], strides = [1, 1]} : vector<64x512xbf16> to vector<64x73xbf16>
    %38 = tpu.concatenate %36, %37 in 1 : vector<64x439xbf16>, vector<64x73xbf16> -> vector<64x512xbf16>
    %c448 = arith.constant 448 : index
    %c0_13 = arith.constant 0 : index
    %39 = vector.load %arg8[%c448, %c0_13] : memref<512x512xbf16, #tpu.memory_space<vmem>>, vector<64x512xbf16>
    tpu.vector_store %arg8[%c448, %c0_13], %38 {strides = array<i32>} : memref<512x512xbf16, #tpu.memory_space<vmem>>, vector<64x512xbf16>,
    %c0_14 = arith.constant 0 : index
    %c0_15 = arith.constant 0 : index
    %40 = vector.load %arg4[%c0_14, %c0_15] : memref<128x512xbf16, #tpu.memory_space<vmem>>, vector<128x512xbf16>
    %c0_16 = arith.constant 0 : index
    %c0_17 = arith.constant 0 : index
    %41 = vector.load %arg8[%c0_16, %c0_17] : memref<512x512xbf16, #tpu.memory_space<vmem>>, vector<512x512xbf16>
    %cst_18 = arith.constant dense<0.000000e+00> : vector<128x512xf32>
    %42 = tpu.matmul %40, %41, %cst_18 {dimension_numbers = #tpu.dot_dimension_numbers<[1], [0], [0], [1], [0, 0, 1, 1], [], []>} : vector<128x512xbf16>, vector<512x512xbf16>, vector<128x512xf32> -> vector<128x512xf32>
    %c0_19 = arith.constant 0 : index
    %c0_20 = arith.constant 0 : index
    %43 = vector.load %arg5[%c0_19, %c0_20] : memref<128x1xf32, #tpu.memory_space<vmem>>, vector<128x1xf32>
    %44 = vector.broadcast %43 : vector<128x1xf32> to vector<128x512xf32>
    %45 = arith.addf %42, %44 : vector<128x512xf32>
    %cst_21 = arith.constant 0.000000e+00 : f32
    %46 = vector.broadcast %cst_21 : f32 to vector<128x512xf32>
    %47 = arith.maximumf %45, %46 : vector<128x512xf32>
    %c0_22 = arith.constant 0 : index
    %c0_23 = arith.constant 0 : index
    %48 = vector.load %arg6[%c0_22, %c0_23] : memref<1x512xf32, #tpu.memory_space<vmem>>, vector<1x512xf32>
    %49 = vector.broadcast %48 : vector<1x512xf32> to vector<128x512xf32>
    %50 = arith.mulf %47, %49 : vector<128x512xf32>
    %cst_24 = arith.constant dense<0.000000e+00> : vector<128xf32>
    %51 = vector.multi_reduction <add>, %50, %cst_24 [1] : vector<128x512xf32> to vector<128xf32>
    %52 = vector.shape_cast %51 : vector<128xf32> to vector<128x1xf32>
    %c0_25 = arith.constant 0 : index
    %c0_26 = arith.constant 0 : index
    %c0_27 = arith.constant 0 : index
    %53 = vector.load %arg7[%c0_25, %c0_26, %c0_27] : memref<1x128x1xf32, #tpu.memory_space<vmem>>, vector<1x128x1xf32>
    %54 = vector.shape_cast %53 : vector<1x128x1xf32> to vector<128x1xf32>
    %55 = vector.shape_cast %52 : vector<128x1xf32> to vector<1x128x1xf32>
    tpu.vector_store %arg7[%c0_25, %c0_26, %c0_27], %55 {strides = array<i32>} : memref<1x128x1xf32, #tpu.memory_space<vmem>>, vector<1x128x1xf32>,
    return
  }
  func.func @transform_0(%arg0: i32) -> (i32, i32) {
    %c0_i32 = arith.constant 0 : i32
    %c0_i32_0 = arith.constant 0 : i32
    return %arg0, %c0_i32 : i32, i32
  }
  func.func @transform_1(%arg0: i32) -> (i32, i32) {
    %c0_i32 = arith.constant 0 : i32
    %c0_i32_0 = arith.constant 0 : i32
    %c0_i32_1 = arith.constant 0 : i32
    return %c0_i32, %c0_i32_0 : i32, i32
  }
  func.func @transform_2(%arg0: i32) -> (i32, i32) {
    %c0_i32 = arith.constant 0 : i32
    %c0_i32_0 = arith.constant 0 : i32
    %c0_i32_1 = arith.constant 0 : i32
    return %c0_i32, %c0_i32_0 : i32, i32
  }
  func.func @transform_3(%arg0: i32) -> (i32, i32) {
    %c0_i32 = arith.constant 0 : i32
    %c0_i32_0 = arith.constant 0 : i32
    %c0_i32_1 = arith.constant 0 : i32
    return %c0_i32, %c0_i32_0 : i32, i32
  }
  func.func @transform_4(%arg0: i32) -> (i32, i32) {
    %c0_i32 = arith.constant 0 : i32
    %c0_i32_0 = arith.constant 0 : i32
    %c0_i32_1 = arith.constant 0 : i32
    return %c0_i32, %c0_i32_0 : i32, i32
  }
  func.func @transform_5(%arg0: i32) -> (i32, i32) {
    %c0_i32 = arith.constant 0 : i32
    %c0_i32_0 = arith.constant 0 : i32
    %c0_i32_1 = arith.constant 0 : i32
    return %c0_i32, %c0_i32_0 : i32, i32
  }
  func.func @transform_6(%arg0: i32) -> (i32, i32, i32) {
    %c0_i32 = arith.constant 0 : i32
    %c0_i32_0 = arith.constant 0 : i32
    %c0_i32_1 = arith.constant 0 : i32
    return %arg0, %c0_i32, %c0_i32_0 : i32, i32, i32
  }
}

</mosaic_0001>

<llo_original>
// kernel: tpu_custom_call.1
$region0: #{tpu_custom_call.1}
  #allocation0 [shape = 'u32[]', space=smem, size = 0x4, offset = 0x4, fixed_abs, tag = 'smem constant byte address 0x4 - core index']
  #allocation1 [shape = 'u32[144,128]{1,0:T(1,128)}', space=vmem, size = 0x12000, scoped, tag = 'internal scratch']
  #allocation2 [shape = 'bf16[512,512]{1,0:T(16,128)(2,1)}', space=vmem, size = 0x80000, scoped, tag = 'scratch operand']
  %s0 = inlined_call_operand.hbm [shape: f32[16,512], index: 0, kind: input, shape index: {}]
  %s1 = inlined_call_operand.vmem [shape: f32[64,1], index: 1, kind: input, shape index: {}]
  %s2 = inlined_call_operand.vmem [shape: f32[64,1], index: 2, kind: input, shape index: {}]
  %s3 = inlined_call_operand.vmem [shape: bf16[128,512], index: 3, kind: input, shape index: {}]
  %s4 = inlined_call_operand.vmem [shape: f32[128,1], index: 4, kind: input, shape index: {}]
  %s5 = inlined_call_operand.vmem [shape: f32[1,512], index: 5, kind: input, shape index: {}]
  %s6 = inlined_call_operand.vmem [shape: f32[2,128,1], index: 6, kind: output, shape index: {}]
  %s7 = sld [smem:[#allocation0]]
  $region61: #{tpu_custom_call.1} parent=0
    _
  %s9 = ssub.s32 1, %s7
  %s10 = scalar_select 0, %s9, %s7
  $region1: #{tpu_custom_call.1} parent=0
    #allocation3 [shape = 'u8[32768]{0}', space=vmem, size = 0x8000, scoped, tag = 'input window, operand 0']
    #allocation4 [shape = 's32[2]{0}', space=sflag, size = 0x8, scoped, tag = 'scoped memory for tpu_custom_call.1']
    %11 = vsyncpa [#allocation4], 0
    %s12 = scalar_lea.sflag [#allocation4], 1
    %13 = vsyncpa %s12, 0
    loop: start=0, step=1, limit=4
    $region2: #{tpu_custom_call.1} parent=1 // loop_pre_header
      _
    $region3: #{tpu_custom_call.1} parent=1 // loop_header
      %s15 = sphi 0, %s19
      %p16 = scmp.ge.s32.totalorder %s15, 4
      %s25 = sphi 0, %s27
      %s28 = sphi 0, %s25
      %s29 = sphi 0, %s28
      %s45 = sphi 0, %s29
      %s49 = sphi 0, %s49
      %s51 = sphi 0, %s49
      %s52 = sphi 0, %s51
      %s66 = sphi 0, %s52
      %s70 = sphi 0, %s70
      %s72 = sphi 0, %s70
      %s73 = sphi 0, %s72
      %s87 = sphi 0, %s73
      %s91 = sphi 0, %s91
      %s93 = sphi 0, %s91
      %s94 = sphi 0, %s93
      %s108 = sphi 0, %s94
      %s112 = sphi 0, %s112
      %s114 = sphi 0, %s112
      %s115 = sphi 0, %s114
      %s129 = sphi 0, %s115
      %s133 = sphi 0, %s133
      %s135 = sphi 0, %s133
      %s136 = sphi 0, %s135
      %s150 = sphi 0, %s136
      %s156 = sphi 0, %s158
      %s159 = sphi 0, %s156
      %s160 = sphi 0, %s159
      %s176 = sphi 0, %s160
    $region4: #{tpu_custom_call.1} parent=1 // loop_header_branch
      %18 = sbr.rel (%p16) target = $region8
    $region5: #{tpu_custom_call.1} parent=1 // loop_body
      %s20 = ssub.s32 %s15, 1
      %s21 = ssub.s32 %s15, 2
      %s22 = sadd.s32 %s15, 1
      %s23 = ssub.s32 %s15, %s22
      %p24 = scmp.eq.s32.totalorder %s23, 0
      %s26 = sadd.s32 %s25, 1
      %s27 = scalar_select %p24, %s25, %s26
      %p30 = pneg %p24
      %p31 = scmp.eq.s32.totalorder %s15, 1
      %p32 = por %p30, %p31
      %p33 = scmp.ne.s32.totalorder %s25, %s28
      %p34 = scmp.eq.s32.totalorder %s15, 0
      %p35 = por %p33, %p34
      %p36 = scmp.ne.s32.totalorder %s25, %s28
      %p37 = scmp.eq.s32.totalorder %s20, 1
      %p38 = por %p36, %p37
      %p39 = scmp.ne.s32.totalorder %s28, %s29
      %p40 = scmp.eq.s32.totalorder %s20, 0
      %p41 = por %p39, %p40
      %p42 = scmp.ne.s32.totalorder %s28, %s29
      %p43 = scmp.eq.s32.totalorder %s21, 1
      %p44 = por %p42, %p43
      %p46 = scmp.ne.s32.totalorder %s29, %s45
      %p47 = scmp.eq.s32.totalorder %s21, 0
      %p48 = por %p46, %p47
      %s50 = sadd.s32 %s49, 1
      %p53 = scmp.eq.s32.totalorder %s15, 1
      %p54 = scmp.ne.s32.totalorder %s49, %s51
      %p55 = scmp.eq.s32.totalorder %s15, 0
      %p56 = por %p54, %p55
      %p57 = scmp.ne.s32.totalorder %s49, %s51
      %p58 = scmp.eq.s32.totalorder %s20, 1
      %p59 = por %p57, %p58
      %p60 = scmp.ne.s32.totalorder %s51, %s52
      %p61 = scmp.eq.s32.totalorder %s20, 0
      %p62 = por %p60, %p61
      %p63 = scmp.ne.s32.totalorder %s51, %s52
      %p64 = scmp.eq.s32.totalorder %s21, 1
      %p65 = por %p63, %p64
      %p67 = scmp.ne.s32.totalorder %s52, %s66
      %p68 = scmp.eq.s32.totalorder %s21, 0
      %p69 = por %p67, %p68
      %s71 = sadd.s32 %s70, 1
      %p74 = scmp.eq.s32.totalorder %s15, 1
      %p75 = scmp.ne.s32.totalorder %s70, %s72
      %p76 = scmp.eq.s32.totalorder %s15, 0
      %p77 = por %p75, %p76
      %p78 = scmp.ne.s32.totalorder %s70, %s72
      %p79 = scmp.eq.s32.totalorder %s20, 1
      %p80 = por %p78, %p79
      %p81 = scmp.ne.s32.totalorder %s72, %s73
      %p82 = scmp.eq.s32.totalorder %s20, 0
      %p83 = por %p81, %p82
      %p84 = scmp.ne.s32.totalorder %s72, %s73
      %p85 = scmp.eq.s32.totalorder %s21, 1
      %p86 = por %p84, %p85
      %p88 = scmp.ne.s32.totalorder %s73, %s87
      %p89 = scmp.eq.s32.totalorder %s21, 0
      %p90 = por %p88, %p89
      %s92 = sadd.s32 %s91, 1
      %p95 = scmp.eq.s32.totalorder %s15, 1
      %p96 = scmp.ne.s32.totalorder %s91, %s93
      %p97 = scmp.eq.s32.totalorder %s15, 0
      %p98 = por %p96, %p97
      %p99 = scmp.ne.s32.totalorder %s91, %s93
      %p100 = scmp.eq.s32.totalorder %s20, 1
      %p101 = por %p99, %p100
      %p102 = scmp.ne.s32.totalorder %s93, %s94
      %p103 = scmp.eq.s32.totalorder %s20, 0
      %p104 = por %p102, %p103
      %p105 = scmp.ne.s32.totalorder %s93, %s94
      %p106 = scmp.eq.s32.totalorder %s21, 1
      %p107 = por %p105, %p106
      %p109 = scmp.ne.s32.totalorder %s94, %s108
      %p110 = scmp.eq.s32.totalorder %s21, 0
      %p111 = por %p109, %p110
      %s113 = sadd.s32 %s112, 1
      %p116 = scmp.eq.s32.totalorder %s15, 1
      %p117 = scmp.ne.s32.totalorder %s112, %s114
      %p118 = scmp.eq.s32.totalorder %s15, 0
      %p119 = por %p117, %p118
      %p120 = scmp.ne.s32.totalorder %s112, %s114
      %p121 = scmp.eq.s32.totalorder %s20, 1
      %p122 = por %p120, %p121
      %p123 = scmp.ne.s32.totalorder %s114, %s115
      %p124 = scmp.eq.s32.totalorder %s20, 0
      %p125 = por %p123, %p124
      %p126 = scmp.ne.s32.totalorder %s114, %s115
      %p127 = scmp.eq.s32.totalorder %s21, 1
      %p128 = por %p126, %p127
      %p130 = scmp.ne.s32.totalorder %s115, %s129
      %p131 = scmp.eq.s32.totalorder %s21, 0
      %p132 = por %p130, %p131
      %s134 = sadd.s32 %s133, 1
      %p137 = scmp.eq.s32.totalorder %s15, 1
      %p138 = scmp.ne.s32.totalorder %s133, %s135
      %p139 = scmp.eq.s32.totalorder %s15, 0
      %p140 = por %p138, %p139
      %p141 = scmp.ne.s32.totalorder %s133, %s135
      %p142 = scmp.eq.s32.totalorder %s20, 1
      %p143 = por %p141, %p142
      %p144 = scmp.ne.s32.totalorder %s135, %s136
      %p145 = scmp.eq.s32.totalorder %s20, 0
      %p146 = por %p144, %p145
      %p147 = scmp.ne.s32.totalorder %s135, %s136
      %p148 = scmp.eq.s32.totalorder %s21, 1
      %p149 = por %p147, %p148
      %p151 = scmp.ne.s32.totalorder %s136, %s150
      %p152 = scmp.eq.s32.totalorder %s21, 0
      %p153 = por %p151, %p152
      %s154 = ssub.s32 %s15, %s22
      %p155 = scmp.eq.s32.totalorder %s154, 0
      %s157 = sadd.s32 %s156, 1
      %s158 = scalar_select %p155, %s156, %s157
      %p161 = pneg %p155
      %p162 = scmp.eq.s32.totalorder %s15, 1
      %p163 = por %p161, %p162
      %p164 = scmp.ne.s32.totalorder %s156, %s159
      %p165 = scmp.eq.s32.totalorder %s15, 0
      %p166 = por %p164, %p165
      %p167 = scmp.ne.s32.totalorder %s156, %s159
      %p168 = scmp.eq.s32.totalorder %s20, 1
      %p169 = por %p167, %p168
      %p170 = scmp.ne.s32.totalorder %s159, %s160
      %p171 = scmp.eq.s32.totalorder %s20, 0
      %p172 = por %p170, %p171
      %p173 = scmp.ne.s32.totalorder %s159, %s160
      %p174 = scmp.eq.s32.totalorder %s21, 1
      %p175 = por %p173, %p174
      %p177 = scmp.ne.s32.totalorder %s160, %s176
      %p178 = scmp.eq.s32.totalorder %s21, 0
      %p179 = por %p177, %p178
      %p180 = scmp.le.s32.totalorder 1, %s15
      %p181 = scmp.lt.s32.totalorder %s15, 3
      %p182 = pnand %p180, %p181
      %p183 = pneg %p182
      // Predicated region
      $region9: #{tpu_custom_call.1} parent=5 // pred_check
        _
      $region10: #{tpu_custom_call.1} parent=5 // pred_check_branch
        %185 = sbr.rel (%p182) target = $region12
      $region11: #{tpu_custom_call.1} parent=5 // pred_region
        %s186 = ssub.s32 %s15, 1
        // Predicated region
        $region13: #{tpu_custom_call.1} parent=11 // pred_check
          %p187 = pneg %p62
        $region14: #{tpu_custom_call.1} parent=11 // pred_check_branch
          %189 = sbr.rel (%p187) target = $region16
        $region15: #{tpu_custom_call.1} parent=11 // pred_region
          _
        $region16: #{tpu_custom_call.1} parent=11 // pred_fallthru
          _
        // Predicated region
        $region17: #{tpu_custom_call.1} parent=11 // pred_check
          %p190 = pneg %p83
        $region18: #{tpu_custom_call.1} parent=11 // pred_check_branch
          %192 = sbr.rel (%p190) target = $region20
        $region19: #{tpu_custom_call.1} parent=11 // pred_region
          _
        $region20: #{tpu_custom_call.1} parent=11 // pred_fallthru
          _
        // Predicated region
        $region21: #{tpu_custom_call.1} parent=11 // pred_check
          %p193 = pneg %p104
        $region22: #{tpu_custom_call.1} parent=11 // pred_check_branch
          %195 = sbr.rel (%p193) target = $region24
        $region23: #{tpu_custom_call.1} parent=11 // pred_region
          _
        $region24: #{tpu_custom_call.1} parent=11 // pred_fallthru
          _
        // Predicated region
        $region25: #{tpu_custom_call.1} parent=11 // pred_check
          %p196 = pneg %p125
        $region26: #{tpu_custom_call.1} parent=11 // pred_check_branch
          %198 = sbr.rel (%p196) target = $region28
        $region27: #{tpu_custom_call.1} parent=11 // pred_region
          _
        $region28: #{tpu_custom_call.1} parent=11 // pred_fallthru
          _
        // Predicated region
        $region29: #{tpu_custom_call.1} parent=11 // pred_check
          %p199 = pneg %p146
        $region30: #{tpu_custom_call.1} parent=11 // pred_check_branch
          %201 = sbr.rel (%p199) target = $region32
        $region31: #{tpu_custom_call.1} parent=11 // pred_region
          _
        $region32: #{tpu_custom_call.1} parent=11 // pred_fallthru
          _
      $region12: #{tpu_custom_call.1} parent=5 // pred_fallthru
        _
      %p202 = scmp.lt.s32.totalorder %s15, 2
      // Predicated region
      $region33: #{tpu_custom_call.1} parent=5 // pred_check
        %p203 = pneg %p202
      $region34: #{tpu_custom_call.1} parent=5 // pred_check_branch
        %205 = sbr.rel (%p203) target = $region36
      $region35: #{tpu_custom_call.1} parent=5 // pred_region
        // Predicated region
        $region37: #{tpu_custom_call.1} parent=35 // pred_check
          %p206 = pneg %p35
        $region38: #{tpu_custom_call.1} parent=35 // pred_check_branch
          %208 = sbr.rel (%p206) target = $region40
        $region39: #{tpu_custom_call.1} parent=35 // pred_region
          %s209 = sand.u32 %s25, 1
          %s210 = scalar_lea.sflag [#allocation4], %s209
          %s211 = sand.u32 %s25, 1
          %s212 = smul.addr %s211, 32
          %s213 = scalar_lea.vmem [#allocation3], %s212
          %s215 = ssub.s32 512, 512
          %216 = vsyncadd %s210, %s215
          %s217 = smul.addr %s15, 4
          %s218 = smul.addr %s217, 128
          %s219 = scalar_lea.hbm %s0, %s218
          %s221 = sshll.u32 %s213, 4
          %s222 = int_to_ptr.vmem [resolvable:$true] %s221
          %224 = dma.hbm_to_vmem [thread:$0]  %s219, 512, %s222, %s210
        $region40: #{tpu_custom_call.1} parent=35 // pred_fallthru
          _
      $region36: #{tpu_custom_call.1} parent=5 // pred_fallthru
        _
      %p225 = scmp.le.s32.totalorder 1, %s15
      %p226 = scmp.lt.s32.totalorder %s15, 3
      %p227 = pnand %p225, %p226
      %p228 = pneg %p227
      // Predicated region
      $region41: #{tpu_custom_call.1} parent=5 // pred_check
        _
      $region42: #{tpu_custom_call.1} parent=5 // pred_check_branch
        %230 = sbr.rel (%p227) target = $region44
      $region43: #{tpu_custom_call.1} parent=5 // pred_region
        %s231 = ssub.s32 %s15, 1
        %s232 = sand.u32 %s28, 1
        %s233 = scalar_lea.sflag [#allocation4], %s232
        %s234 = sand.u32 %s28, 1
        %s235 = smul.addr %s234, 32
        %s236 = scalar_lea.vmem [#allocation3], %s235
        // Predicated region
        $region45: #{tpu_custom_call.1} parent=43 // pred_check
          %p237 = pneg %p41
        $region46: #{tpu_custom_call.1} parent=43 // pred_check_branch
          %239 = sbr.rel (%p237) target = $region48
        $region47: #{tpu_custom_call.1} parent=43 // pred_region
          %240 = dma.done %s233, 512
        $region48: #{tpu_custom_call.1} parent=43 // pred_fallthru
          _
        %s241 = sand.u32 %s28, 1
        %s242 = scalar_lea.sflag [#allocation4], %s241
        %s243 = sand.u32 %s28, 1
        %s244 = smul.addr %s243, 32
        %s245 = scalar_lea.vmem [#allocation3], %s244
        %p246 = pneg %p41
        %p247 = pneg %p38
        %p248 = pneg %p62
        %p249 = pneg %p59
        %p250 = pneg %p83
        %p251 = pneg %p80
        %p252 = pneg %p104
        %p253 = pneg %p101
        %p254 = pneg %p125
        %p255 = pneg %p122
        %p256 = pneg %p146
        %p257 = pneg %p143
        %p258 = pneg %p172
        %p259 = pneg %p169
        %p260 = scmp.lt.s32.totalorder %s20, 1
        %s261 = scalar_select %p260, %s20, 1
        %s262 = smul.addr %s261, 16
        %s263 = smul.addr %s262, 8
        %s264 = scalar_lea.vmem %s6, %s263
        %p265 = scmp.lt.s32.totalorder %s20, 1
        %s266 = scalar_select %p265, %s20, 1
        %s267 = smul.addr %s266, 16
        %s268 = smul.addr %s267, 8
        %s269 = scalar_lea.vmem %s6, %s268
        %v270 = vld [vmem:[%s236] sm:$0xff]
        %v271 = vld [vmem:[%s236 + $0x8] sm:$0xff]
        %v272 = vld [vmem:[%s236 + $0x10] sm:$0xff]
        %v273 = vld [vmem:[%s236 + $0x18] sm:$0xff]
        %v274 = vld [vmem:[%s1] sm:$0xff]
        %v275 = vld [vmem:[%s1 + $0x8] sm:$0xff]
        %v276 = vld [vmem:[%s1 + $0x10] sm:$0xff]
        %v277 = vld [vmem:[%s1 + $0x18] sm:$0xff]
        %v278 = vld [vmem:[%s1 + $0x20] sm:$0xff]
        %v279 = vld [vmem:[%s1 + $0x28] sm:$0xff]
        %v280 = vld [vmem:[%s1 + $0x30] sm:$0xff]
        %v281 = vld [vmem:[%s1 + $0x38] sm:$0xff]
        %283 = vset.pattern.permute.xlu0 0
        %284 = vperm.xlu0 %283, %v274
        %v285 = vpop.permute.xlu0 %284
        %288 = vset.pattern.permute.xlu0 0
        %289 = vperm.xlu0 %288, %v275
        %v290 = vpop.permute.xlu0 %289
        %293 = vset.pattern.permute.xlu0 0
        %294 = vperm.xlu0 %293, %v276
        %v295 = vpop.permute.xlu0 %294
        %298 = vset.pattern.permute.xlu0 0
        %299 = vperm.xlu0 %298, %v277
        %v300 = vpop.permute.xlu0 %299
        %303 = vset.pattern.permute.xlu0 0
        %304 = vperm.xlu0 %303, %v278
        %v305 = vpop.permute.xlu0 %304
        %308 = vset.pattern.permute.xlu0 0
        %309 = vperm.xlu0 %308, %v279
        %v310 = vpop.permute.xlu0 %309
        %313 = vset.pattern.permute.xlu0 0
        %314 = vperm.xlu0 %313, %v280
        %v315 = vpop.permute.xlu0 %314
        %318 = vset.pattern.permute.xlu0 0
        %319 = vperm.xlu0 %318, %v281
        %v320 = vpop.permute.xlu0 %319
        %v322 = vmul.f32 %v285, %v270
        %v323 = vmul.f32 %v285, %v271
        %v324 = vmul.f32 %v285, %v272
        %v325 = vmul.f32 %v285, %v273
        %v326 = vmul.f32 %v290, %v270
        %v327 = vmul.f32 %v290, %v271
        %v328 = vmul.f32 %v290, %v272
        %v329 = vmul.f32 %v290, %v273
        %v330 = vmul.f32 %v295, %v270
        %v331 = vmul.f32 %v295, %v271
        %v332 = vmul.f32 %v295, %v272
        %v333 = vmul.f32 %v295, %v273
        %v334 = vmul.f32 %v300, %v270
        %v335 = vmul.f32 %v300, %v271
        %v336 = vmul.f32 %v300, %v272
        %v337 = vmul.f32 %v300, %v273
        %v338 = vmul.f32 %v305, %v270
        %v339 = vmul.f32 %v305, %v271
        %v340 = vmul.f32 %v305, %v272
        %v341 = vmul.f32 %v305, %v273
        %v342 = vmul.f32 %v310, %v270
        %v343 = vmul.f32 %v310, %v271
        %v344 = vmul.f32 %v310, %v272
        %v345 = vmul.f32 %v310, %v273
        %v346 = vmul.f32 %v315, %v270
        %v347 = vmul.f32 %v315, %v271
        %v348 = vmul.f32 %v315, %v272
        %v349 = vmul.f32 %v315, %v273
        %v350 = vmul.f32 %v320, %v270
        %v351 = vmul.f32 %v320, %v271
        %v352 = vmul.f32 %v320, %v272
        %v353 = vmul.f32 %v320, %v273
        %v354 = vld [vmem:[%s2] sm:$0xff]
        %v355 = vld [vmem:[%s2 + $0x8] sm:$0xff]
        %v356 = vld [vmem:[%s2 + $0x10] sm:$0xff]
        %v357 = vld [vmem:[%s2 + $0x18] sm:$0xff]
        %v358 = vld [vmem:[%s2 + $0x20] sm:$0xff]
        %v359 = vld [vmem:[%s2 + $0x28] sm:$0xff]
        %v360 = vld [vmem:[%s2 + $0x30] sm:$0xff]
        %v361 = vld [vmem:[%s2 + $0x38] sm:$0xff]
        %363 = vset.pattern.permute.xlu0 0
        %364 = vperm.xlu0 %363, %v354
        %v365 = vpop.permute.xlu0 %364
        %368 = vset.pattern.permute.xlu0 0
        %369 = vperm.xlu0 %368, %v355
        %v370 = vpop.permute.xlu0 %369
        %373 = vset.pattern.permute.xlu0 0
        %374 = vperm.xlu0 %373, %v356
        %v375 = vpop.permute.xlu0 %374
        %378 = vset.pattern.permute.xlu0 0
        %379 = vperm.xlu0 %378, %v357
        %v380 = vpop.permute.xlu0 %379
        %383 = vset.pattern.permute.xlu0 0
        %384 = vperm.xlu0 %383, %v358
        %v385 = vpop.permute.xlu0 %384
        %388 = vset.pattern.permute.xlu0 0
        %389 = vperm.xlu0 %388, %v359
        %v390 = vpop.permute.xlu0 %389
        %393 = vset.pattern.permute.xlu0 0
        %394 = vperm.xlu0 %393, %v360
        %v395 = vpop.permute.xlu0 %394
        %398 = vset.pattern.permute.xlu0 0
        %399 = vperm.xlu0 %398, %v361
        %v400 = vpop.permute.xlu0 %399
        %v402 = vadd.f32 %v322, %v365
        %v403 = vadd.f32 %v323, %v365
        %v404 = vadd.f32 %v324, %v365
        %v405 = vadd.f32 %v325, %v365
        %v406 = vadd.f32 %v326, %v370
        %v407 = vadd.f32 %v327, %v370
        %v408 = vadd.f32 %v328, %v370
        %v409 = vadd.f32 %v329, %v370
        %v410 = vadd.f32 %v330, %v375
        %v411 = vadd.f32 %v331, %v375
        %v412 = vadd.f32 %v332, %v375
        %v413 = vadd.f32 %v333, %v375
        %v414 = vadd.f32 %v334, %v380
        %v415 = vadd.f32 %v335, %v380
        %v416 = vadd.f32 %v336, %v380
        %v417 = vadd.f32 %v337, %v380
        %v418 = vadd.f32 %v338, %v385
        %v419 = vadd.f32 %v339, %v385
        %v420 = vadd.f32 %v340, %v385
        %v421 = vadd.f32 %v341, %v385
        %v422 = vadd.f32 %v342, %v390
        %v423 = vadd.f32 %v343, %v390
        %v424 = vadd.f32 %v344, %v390
        %v425 = vadd.f32 %v345, %v390
        %v426 = vadd.f32 %v346, %v395
        %v427 = vadd.f32 %v347, %v395
        %v428 = vadd.f32 %v348, %v395
        %v429 = vadd.f32 %v349, %v395
        %v430 = vadd.f32 %v350, %v400
        %v431 = vadd.f32 %v351, %v400
        %v432 = vadd.f32 %v352, %v400
        %v433 = vadd.f32 %v353, %v400
        %v434 = vmax.f32 %v402, 0.0
        %v435 = vmax.f32 %v403, 0.0
        %v436 = vmax.f32 %v404, 0.0
        %v437 = vmax.f32 %v405, 0.0
        %v438 = vmax.f32 %v406, 0.0
        %v439 = vmax.f32 %v407, 0.0
        %v440 = vmax.f32 %v408, 0.0
        %v441 = vmax.f32 %v409, 0.0
        %v442 = vmax.f32 %v410, 0.0
        %v443 = vmax.f32 %v411, 0.0
        %v444 = vmax.f32 %v412, 0.0
        %v445 = vmax.f32 %v413, 0.0
        %v446 = vmax.f32 %v414, 0.0
        %v447 = vmax.f32 %v415, 0.0
        %v448 = vmax.f32 %v416, 0.0
        %v449 = vmax.f32 %v417, 0.0
        %v450 = vmax.f32 %v418, 0.0
        %v451 = vmax.f32 %v419, 0.0
        %v452 = vmax.f32 %v420, 0.0
        %v453 = vmax.f32 %v421, 0.0
        %v454 = vmax.f32 %v422, 0.0
        %v455 = vmax.f32 %v423, 0.0
        %v456 = vmax.f32 %v424, 0.0
        %v457 = vmax.f32 %v425, 0.0
        %v458 = vmax.f32 %v426, 0.0
        %v459 = vmax.f32 %v427, 0.0
        %v460 = vmax.f32 %v428, 0.0
        %v461 = vmax.f32 %v429, 0.0
        %v462 = vmax.f32 %v430, 0.0
        %v463 = vmax.f32 %v431, 0.0
        %v464 = vmax.f32 %v432, 0.0
        %v465 = vmax.f32 %v433, 0.0
        %v466 = vpack.c.bf16 %v438, %v434
        %v467 = vpack.c.bf16 %v439, %v435
        %v468 = vpack.c.bf16 %v440, %v436
        %v469 = vpack.c.bf16 %v441, %v437
        %v470 = vpack.c.bf16 %v446, %v442
        %v471 = vpack.c.bf16 %v447, %v443
        %v472 = vpack.c.bf16 %v448, %v444
        %v473 = vpack.c.bf16 %v449, %v445
        %v474 = vpack.c.bf16 %v454, %v450
        %v475 = vpack.c.bf16 %v455, %v451
        %v476 = vpack.c.bf16 %v456, %v452
        %v477 = vpack.c.bf16 %v457, %v453
        %v478 = vpack.c.bf16 %v462, %v458
        %v479 = vpack.c.bf16 %v463, %v459
        %v480 = vpack.c.bf16 %v464, %v460
        %v481 = vpack.c.bf16 %v465, %v461
        %482 = vst [vmem:[#allocation2] sm:$0xff] %v466
        %483 = vst [vmem:[#allocation2 + $0x8] sm:$0xff] %v467
        %484 = vst [vmem:[#allocation2 + $0x10] sm:$0xff] %v468
        %485 = vst [vmem:[#allocation2 + $0x18] sm:$0xff] %v469
        %486 = vst [vmem:[#allocation2 + $0x20] sm:$0xff] %v470
        %487 = vst [vmem:[#allocation2 + $0x28] sm:$0xff] %v471
        %488 = vst [vmem:[#allocation2 + $0x30] sm:$0xff] %v472
        %489 = vst [vmem:[#allocation2 + $0x38] sm:$0xff] %v473
        %490 = vst [vmem:[#allocation2 + $0x40] sm:$0xff] %v474
        %491 = vst [vmem:[#allocation2 + $0x48] sm:$0xff] %v475
        %492 = vst [vmem:[#allocation2 + $0x50] sm:$0xff] %v476
        %493 = vst [vmem:[#allocation2 + $0x58] sm:$0xff] %v477
        %494 = vst [vmem:[#allocation2 + $0x60] sm:$0xff] %v478
        %495 = vst [vmem:[#allocation2 + $0x68] sm:$0xff] %v479
        %496 = vst [vmem:[#allocation2 + $0x70] sm:$0xff] %v480
        %497 = vst [vmem:[#allocation2 + $0x78] sm:$0xff] %v481
        %514 = vrot.lane.b32.xlu0 %v466, 127
        %v515 = vpop.permute.xlu0 %514
        %516 = vrot.lane.b32.xlu0 %v467, 127
        %v517 = vpop.permute.xlu0 %516
        %518 = vrot.lane.b32.xlu0 %v468, 127
        %v519 = vpop.permute.xlu0 %518
        %520 = vrot.lane.b32.xlu0 %v469, 127
        %v521 = vpop.permute.xlu0 %520
        %522 = vrot.lane.b32.xlu0 %v470, 127
        %v523 = vpop.permute.xlu0 %522
        %524 = vrot.lane.b32.xlu0 %v471, 127
        %v525 = vpop.permute.xlu0 %524
        %526 = vrot.lane.b32.xlu0 %v472, 127
        %v527 = vpop.permute.xlu0 %526
        %528 = vrot.lane.b32.xlu0 %v473, 127
        %v529 = vpop.permute.xlu0 %528
        %530 = vrot.lane.b32.xlu0 %v474, 127
        %v531 = vpop.permute.xlu0 %530
        %532 = vrot.lane.b32.xlu0 %v475, 127
        %v533 = vpop.permute.xlu0 %532
        %534 = vrot.lane.b32.xlu0 %v476, 127
        %v535 = vpop.permute.xlu0 %534
        %536 = vrot.lane.b32.xlu0 %v477, 127
        %v537 = vpop.permute.xlu0 %536
        %538 = vrot.lane.b32.xlu0 %v478, 127
        %v539 = vpop.permute.xlu0 %538
        %540 = vrot.lane.b32.xlu0 %v479, 127
        %v541 = vpop.permute.xlu0 %540
        %542 = vrot.lane.b32.xlu0 %v480, 127
        %v543 = vpop.permute.xlu0 %542
        %544 = vrot.lane.b32.xlu0 %v481, 127
        %v545 = vpop.permute.xlu0 %544
        %vm546 = vcmask 1039360
        %v547 = vsel %vm546, %v515, %v517
        %v548 = vsel %vm546, %v517, %v519
        %v549 = vsel %vm546, %v519, %v521
        %v550 = vsel %vm546, %v523, %v525
        %v551 = vsel %vm546, %v525, %v527
        %v552 = vsel %vm546, %v527, %v529
        %v553 = vsel %vm546, %v531, %v533
        %v554 = vsel %vm546, %v533, %v535
        %v555 = vsel %vm546, %v535, %v537
        %v556 = vsel %vm546, %v539, %v541
        %v557 = vsel %vm546, %v541, %v543
        %v558 = vsel %vm546, %v543, %v545
        %vm571 = vcmask 1039360
        %v574 = vsel %vm571, %v521, %v515
        %v578 = vsel %vm571, %v529, %v523
        %v582 = vsel %vm571, %v537, %v531
        %v586 = vsel %vm571, %v545, %v539
        %588 = vst [vmem:[#allocation2 + $0x80] sm:$0xff] %v547
        %589 = vst [vmem:[#allocation2 + $0x88] sm:$0xff] %v548
        %590 = vst [vmem:[#allocation2 + $0x90] sm:$0xff] %v549
        %591 = vst [vmem:[#allocation2 + $0x98] sm:$0xff] %v574
        %592 = vst [vmem:[#allocation2 + $0xa0] sm:$0xff] %v550
        %593 = vst [vmem:[#allocation2 + $0xa8] sm:$0xff] %v551
        %594 = vst [vmem:[#allocation2 + $0xb0] sm:$0xff] %v552
        %595 = vst [vmem:[#allocation2 + $0xb8] sm:$0xff] %v578
        %596 = vst [vmem:[#allocation2 + $0xc0] sm:$0xff] %v553
        %597 = vst [vmem:[#allocation2 + $0xc8] sm:$0xff] %v554
        %598 = vst [vmem:[#allocation2 + $0xd0] sm:$0xff] %v555
        %599 = vst [vmem:[#allocation2 + $0xd8] sm:$0xff] %v582
        %600 = vst [vmem:[#allocation2 + $0xe0] sm:$0xff] %v556
        %601 = vst [vmem:[#allocation2 + $0xe8] sm:$0xff] %v557
        %602 = vst [vmem:[#allocation2 + $0xf0] sm:$0xff] %v558
        %603 = vst [vmem:[#allocation2 + $0xf8] sm:$0xff] %v586
        %604 = vrot.lane.b32.xlu0 %v466, 120
        %v605 = vpop.permute.xlu0 %604
        %606 = vrot.lane.b32.xlu0 %v467, 120
        %v607 = vpop.permute.xlu0 %606
        %608 = vrot.lane.b32.xlu0 %v468, 120
        %v609 = vpop.permute.xlu0 %608
        %610 = vrot.lane.b32.xlu0 %v469, 120
        %v611 = vpop.permute.xlu0 %610
        %612 = vrot.lane.b32.xlu0 %v470, 120
        %v613 = vpop.permute.xlu0 %612
        %614 = vrot.lane.b32.xlu0 %v471, 120
        %v615 = vpop.permute.xlu0 %614
        %616 = vrot.lane.b32.xlu0 %v472, 120
        %v617 = vpop.permute.xlu0 %616
        %618 = vrot.lane.b32.xlu0 %v473, 120
        %v619 = vpop.permute.xlu0 %618
        %620 = vrot.lane.b32.xlu0 %v474, 120
        %v621 = vpop.permute.xlu0 %620
        %622 = vrot.lane.b32.xlu0 %v475, 120
        %v623 = vpop.permute.xlu0 %622
        %624 = vrot.lane.b32.xlu0 %v476, 120
        %v625 = vpop.permute.xlu0 %624
        %626 = vrot.lane.b32.xlu0 %v477, 120
        %v627 = vpop.permute.xlu0 %626
        %628 = vrot.lane.b32.xlu0 %v478, 120
        %v629 = vpop.permute.xlu0 %628
        %630 = vrot.lane.b32.xlu0 %v479, 120
        %v631 = vpop.permute.xlu0 %630
        %632 = vrot.lane.b32.xlu0 %v480, 120
        %v633 = vpop.permute.xlu0 %632
        %634 = vrot.lane.b32.xlu0 %v481, 120
        %v635 = vpop.permute.xlu0 %634
        %vm636 = vcmask 982016
        %v637 = vsel %vm636, %v605, %v607
        %v638 = vsel %vm636, %v607, %v609
        %v639 = vsel %vm636, %v609, %v611
        %v640 = vsel %vm636, %v613, %v615
        %v641 = vsel %vm636, %v615, %v617
        %v642 = vsel %vm636, %v617, %v619
        %v643 = vsel %vm636, %v621, %v623
        %v644 = vsel %vm636, %v623, %v625
        %v645 = vsel %vm636, %v625, %v627
        %v646 = vsel %vm636, %v629, %v631
        %v647 = vsel %vm636, %v631, %v633
        %v648 = vsel %vm636, %v633, %v635
        %vm661 = vcmask 982016
        %v664 = vsel %vm661, %v611, %v605
        %v668 = vsel %vm661, %v619, %v613
        %v672 = vsel %vm661, %v627, %v621
        %v676 = vsel %vm661, %v635, %v629
        %678 = vst [vmem:[#allocation2 + $0x100] sm:$0xff] %v637
        %679 = vst [vmem:[#allocation2 + $0x108] sm:$0xff] %v638
        %680 = vst [vmem:[#allocation2 + $0x110] sm:$0xff] %v639
        %681 = vst [vmem:[#allocation2 + $0x118] sm:$0xff] %v664
        %682 = vst [vmem:[#allocation2 + $0x120] sm:$0xff] %v640
        %683 = vst [vmem:[#allocation2 + $0x128] sm:$0xff] %v641
        %684 = vst [vmem:[#allocation2 + $0x130] sm:$0xff] %v642
        %685 = vst [vmem:[#allocation2 + $0x138] sm:$0xff] %v668
        %686 = vst [vmem:[#allocation2 + $0x140] sm:$0xff] %v643
        %687 = vst [vmem:[#allocation2 + $0x148] sm:$0xff] %v644
        %688 = vst [vmem:[#allocation2 + $0x150] sm:$0xff] %v645
        %689 = vst [vmem:[#allocation2 + $0x158] sm:$0xff] %v672
        %690 = vst [vmem:[#allocation2 + $0x160] sm:$0xff] %v646
        %691 = vst [vmem:[#allocation2 + $0x168] sm:$0xff] %v647
        %692 = vst [vmem:[#allocation2 + $0x170] sm:$0xff] %v648
        %693 = vst [vmem:[#allocation2 + $0x178] sm:$0xff] %v676
        %694 = vrot.lane.b32.xlu0 %v466, 119
        %v695 = vpop.permute.xlu0 %694
        %696 = vrot.lane.b32.xlu0 %v467, 119
        %v697 = vpop.permute.xlu0 %696
        %698 = vrot.lane.b32.xlu0 %v468, 119
        %v699 = vpop.permute.xlu0 %698
        %700 = vrot.lane.b32.xlu0 %v469, 119
        %v701 = vpop.permute.xlu0 %700
        %702 = vrot.lane.b32.xlu0 %v470, 119
        %v703 = vpop.permute.xlu0 %702
        %704 = vrot.lane.b32.xlu0 %v471, 119
        %v705 = vpop.permute.xlu0 %704
        %706 = vrot.lane.b32.xlu0 %v472, 119
        %v707 = vpop.permute.xlu0 %706
        %708 = vrot.lane.b32.xlu0 %v473, 119
        %v709 = vpop.permute.xlu0 %708
        %710 = vrot.lane.b32.xlu0 %v474, 119
        %v711 = vpop.permute.xlu0 %710
        %712 = vrot.lane.b32.xlu0 %v475, 119
        %v713 = vpop.permute.xlu0 %712
        %714 = vrot.lane.b32.xlu0 %v476, 119
        %v715 = vpop.permute.xlu0 %714
        %716 = vrot.lane.b32.xlu0 %v477, 119
        %v717 = vpop.permute.xlu0 %716
        %718 = vrot.lane.b32.xlu0 %v478, 119
        %v719 = vpop.permute.xlu0 %718
        %720 = vrot.lane.b32.xlu0 %v479, 119
        %v721 = vpop.permute.xlu0 %720
        %722 = vrot.lane.b32.xlu0 %v480, 119
        %v723 = vpop.permute.xlu0 %722
        %724 = vrot.lane.b32.xlu0 %v481, 119
        %v725 = vpop.permute.xlu0 %724
        %vm726 = vcmask 973824
        %v727 = vsel %vm726, %v695, %v697
        %v728 = vsel %vm726, %v697, %v699
        %v729 = vsel %vm726, %v699, %v701
        %v730 = vsel %vm726, %v703, %v705
        %v731 = vsel %vm726, %v705, %v707
        %v732 = vsel %vm726, %v707, %v709
        %v733 = vsel %vm726, %v711, %v713
        %v734 = vsel %vm726, %v713, %v715
        %v735 = vsel %vm726, %v715, %v717
        %v736 = vsel %vm726, %v719, %v721
        %v737 = vsel %vm726, %v721, %v723
        %v738 = vsel %vm726, %v723, %v725
        %vm751 = vcmask 973824
        %v754 = vsel %vm751, %v701, %v695
        %v758 = vsel %vm751, %v709, %v703
        %v762 = vsel %vm751, %v717, %v711
        %v766 = vsel %vm751, %v725, %v719
        %768 = vst [vmem:[#allocation2 + $0x180] sm:$0xff] %v727
        %769 = vst [vmem:[#allocation2 + $0x188] sm:$0xff] %v728
        %770 = vst [vmem:[#allocation2 + $0x190] sm:$0xff] %v729
        %771 = vst [vmem:[#allocation2 + $0x198] sm:$0xff] %v754
        %772 = vst [vmem:[#allocation2 + $0x1a0] sm:$0xff] %v730
        %773 = vst [vmem:[#allocation2 + $0x1a8] sm:$0xff] %v731
        %774 = vst [vmem:[#allocation2 + $0x1b0] sm:$0xff] %v732
        %775 = vst [vmem:[#allocation2 + $0x1b8] sm:$0xff] %v758
        %776 = vst [vmem:[#allocation2 + $0x1c0] sm:$0xff] %v733
        %777 = vst [vmem:[#allocation2 + $0x1c8] sm:$0xff] %v734
        %778 = vst [vmem:[#allocation2 + $0x1d0] sm:$0xff] %v735
        %779 = vst [vmem:[#allocation2 + $0x1d8] sm:$0xff] %v762
        %780 = vst [vmem:[#allocation2 + $0x1e0] sm:$0xff] %v736
        %781 = vst [vmem:[#allocation2 + $0x1e8] sm:$0xff] %v737
        %782 = vst [vmem:[#allocation2 + $0x1f0] sm:$0xff] %v738
        %783 = vst [vmem:[#allocation2 + $0x1f8] sm:$0xff] %v766
        %784 = vrot.lane.b32.xlu0 %v466, 64
        %v785 = vpop.permute.xlu0 %784
        %786 = vrot.lane.b32.xlu0 %v467, 64
        %v787 = vpop.permute.xlu0 %786
        %788 = vrot.lane.b32.xlu0 %v468, 64
        %v789 = vpop.permute.xlu0 %788
        %790 = vrot.lane.b32.xlu0 %v469, 64
        %v791 = vpop.permute.xlu0 %790
        %792 = vrot.lane.b32.xlu0 %v470, 64
        %v793 = vpop.permute.xlu0 %792
        %794 = vrot.lane.b32.xlu0 %v471, 64
        %v795 = vpop.permute.xlu0 %794
        %796 = vrot.lane.b32.xlu0 %v472, 64
        %v797 = vpop.permute.xlu0 %796
        %798 = vrot.lane.b32.xlu0 %v473, 64
        %v799 = vpop.permute.xlu0 %798
        %800 = vrot.lane.b32.xlu0 %v474, 64
        %v801 = vpop.permute.xlu0 %800
        %802 = vrot.lane.b32.xlu0 %v475, 64
        %v803 = vpop.permute.xlu0 %802
        %804 = vrot.lane.b32.xlu0 %v476, 64
        %v805 = vpop.permute.xlu0 %804
        %806 = vrot.lane.b32.xlu0 %v477, 64
        %v807 = vpop.permute.xlu0 %806
        %808 = vrot.lane.b32.xlu0 %v478, 64
        %v809 = vpop.permute.xlu0 %808
        %810 = vrot.lane.b32.xlu0 %v479, 64
        %v811 = vpop.permute.xlu0 %810
        %812 = vrot.lane.b32.xlu0 %v480, 64
        %v813 = vpop.permute.xlu0 %812
        %814 = vrot.lane.b32.xlu0 %v481, 64
        %v815 = vpop.permute.xlu0 %814
        %vm816 = vcmask 523264
        %v817 = vsel %vm816, %v785, %v787
        %v818 = vsel %vm816, %v787, %v789
        %v819 = vsel %vm816, %v789, %v791
        %v820 = vsel %vm816, %v793, %v795
        %v821 = vsel %vm816, %v795, %v797
        %v822 = vsel %vm816, %v797, %v799
        %v823 = vsel %vm816, %v801, %v803
        %v824 = vsel %vm816, %v803, %v805
        %v825 = vsel %vm816, %v805, %v807
        %v826 = vsel %vm816, %v809, %v811
        %v827 = vsel %vm816, %v811, %v813
        %v828 = vsel %vm816, %v813, %v815
        %vm841 = vcmask 523264
        %v844 = vsel %vm841, %v791, %v785
        %v848 = vsel %vm841, %v799, %v793
        %v852 = vsel %vm841, %v807, %v801
        %v856 = vsel %vm841, %v815, %v809
        %858 = vst [vmem:[#allocation2 + $0x200] sm:$0xff] %v817
        %859 = vst [vmem:[#allocation2 + $0x208] sm:$0xff] %v818
        %860 = vst [vmem:[#allocation2 + $0x210] sm:$0xff] %v819
        %861 = vst [vmem:[#allocation2 + $0x218] sm:$0xff] %v844
        %862 = vst [vmem:[#allocation2 + $0x220] sm:$0xff] %v820
        %863 = vst [vmem:[#allocation2 + $0x228] sm:$0xff] %v821
        %864 = vst [vmem:[#allocation2 + $0x230] sm:$0xff] %v822
        %865 = vst [vmem:[#allocation2 + $0x238] sm:$0xff] %v848
        %866 = vst [vmem:[#allocation2 + $0x240] sm:$0xff] %v823
        %867 = vst [vmem:[#allocation2 + $0x248] sm:$0xff] %v824
        %868 = vst [vmem:[#allocation2 + $0x250] sm:$0xff] %v825
        %869 = vst [vmem:[#allocation2 + $0x258] sm:$0xff] %v852
        %870 = vst [vmem:[#allocation2 + $0x260] sm:$0xff] %v826
        %871 = vst [vmem:[#allocation2 + $0x268] sm:$0xff] %v827
        %872 = vst [vmem:[#allocation2 + $0x270] sm:$0xff] %v828
        %873 = vst [vmem:[#allocation2 + $0x278] sm:$0xff] %v856
        %874 = vrot.lane.b32.xlu0 %v466, 63
        %v875 = vpop.permute.xlu0 %874
        %876 = vrot.lane.b32.xlu0 %v467, 63
        %v877 = vpop.permute.xlu0 %876
        %878 = vrot.lane.b32.xlu0 %v468, 63
        %v879 = vpop.permute.xlu0 %878
        %880 = vrot.lane.b32.xlu0 %v469, 63
        %v881 = vpop.permute.xlu0 %880
        %882 = vrot.lane.b32.xlu0 %v470, 63
        %v883 = vpop.permute.xlu0 %882
        %884 = vrot.lane.b32.xlu0 %v471, 63
        %v885 = vpop.permute.xlu0 %884
        %886 = vrot.lane.b32.xlu0 %v472, 63
        %v887 = vpop.permute.xlu0 %886
        %888 = vrot.lane.b32.xlu0 %v473, 63
        %v889 = vpop.permute.xlu0 %888
        %890 = vrot.lane.b32.xlu0 %v474, 63
        %v891 = vpop.permute.xlu0 %890
        %892 = vrot.lane.b32.xlu0 %v475, 63
        %v893 = vpop.permute.xlu0 %892
        %894 = vrot.lane.b32.xlu0 %v476, 63
        %v895 = vpop.permute.xlu0 %894
        %896 = vrot.lane.b32.xlu0 %v477, 63
        %v897 = vpop.permute.xlu0 %896
        %898 = vrot.lane.b32.xlu0 %v478, 63
        %v899 = vpop.permute.xlu0 %898
        %900 = vrot.lane.b32.xlu0 %v479, 63
        %v901 = vpop.permute.xlu0 %900
        %902 = vrot.lane.b32.xlu0 %v480, 63
        %v903 = vpop.permute.xlu0 %902
        %904 = vrot.lane.b32.xlu0 %v481, 63
        %v905 = vpop.permute.xlu0 %904
        %vm906 = vcmask 515072
        %v907 = vsel %vm906, %v875, %v877
        %v908 = vsel %vm906, %v877, %v879
        %v909 = vsel %vm906, %v879, %v881
        %v910 = vsel %vm906, %v883, %v885
        %v911 = vsel %vm906, %v885, %v887
        %v912 = vsel %vm906, %v887, %v889
        %v913 = vsel %vm906, %v891, %v893
        %v914 = vsel %vm906, %v893, %v895
        %v915 = vsel %vm906, %v895, %v897
        %v916 = vsel %vm906, %v899, %v901
        %v917 = vsel %vm906, %v901, %v903
        %v918 = vsel %vm906, %v903, %v905
        %vm931 = vcmask 515072
        %v934 = vsel %vm931, %v881, %v875
        %v938 = vsel %vm931, %v889, %v883
        %v942 = vsel %vm931, %v897, %v891
        %v946 = vsel %vm931, %v905, %v899
        %948 = vst [vmem:[#allocation2 + $0x280] sm:$0xff] %v907
        %949 = vst [vmem:[#allocation2 + $0x288] sm:$0xff] %v908
        %950 = vst [vmem:[#allocation2 + $0x290] sm:$0xff] %v909
        %951 = vst [vmem:[#allocation2 + $0x298] sm:$0xff] %v934
        %952 = vst [vmem:[#allocation2 + $0x2a0] sm:$0xff] %v910
        %953 = vst [vmem:[#allocation2 + $0x2a8] sm:$0xff] %v911
        %954 = vst [vmem:[#allocation2 + $0x2b0] sm:$0xff] %v912
        %955 = vst [vmem:[#allocation2 + $0x2b8] sm:$0xff] %v938
        %956 = vst [vmem:[#allocation2 + $0x2c0] sm:$0xff] %v913
        %957 = vst [vmem:[#allocation2 + $0x2c8] sm:$0xff] %v914
        %958 = vst [vmem:[#allocation2 + $0x2d0] sm:$0xff] %v915
        %959 = vst [vmem:[#allocation2 + $0x2d8] sm:$0xff] %v942
        %960 = vst [vmem:[#allocation2 + $0x2e0] sm:$0xff] %v916
        %961 = vst [vmem:[#allocation2 + $0x2e8] sm:$0xff] %v917
        %962 = vst [vmem:[#allocation2 + $0x2f0] sm:$0xff] %v918
        %963 = vst [vmem:[#allocation2 + $0x2f8] sm:$0xff] %v946
        %964 = vrot.lane.b32.xlu0 %v466, 56
        %v965 = vpop.permute.xlu0 %964
        %966 = vrot.lane.b32.xlu0 %v467, 56
        %v967 = vpop.permute.xlu0 %966
        %968 = vrot.lane.b32.xlu0 %v468, 56
        %v969 = vpop.permute.xlu0 %968
        %970 = vrot.lane.b32.xlu0 %v469, 56
        %v971 = vpop.permute.xlu0 %970
        %972 = vrot.lane.b32.xlu0 %v470, 56
        %v973 = vpop.permute.xlu0 %972
        %974 = vrot.lane.b32.xlu0 %v471, 56
        %v975 = vpop.permute.xlu0 %974
        %976 = vrot.lane.b32.xlu0 %v472, 56
        %v977 = vpop.permute.xlu0 %976
        %978 = vrot.lane.b32.xlu0 %v473, 56
        %v979 = vpop.permute.xlu0 %978
        %980 = vrot.lane.b32.xlu0 %v474, 56
        %v981 = vpop.permute.xlu0 %980
        %982 = vrot.lane.b32.xlu0 %v475, 56
        %v983 = vpop.permute.xlu0 %982
        %984 = vrot.lane.b32.xlu0 %v476, 56
        %v985 = vpop.permute.xlu0 %984
        %986 = vrot.lane.b32.xlu0 %v477, 56
        %v987 = vpop.permute.xlu0 %986
        %988 = vrot.lane.b32.xlu0 %v478, 56
        %v989 = vpop.permute.xlu0 %988
        %990 = vrot.lane.b32.xlu0 %v479, 56
        %v991 = vpop.permute.xlu0 %990
        %992 = vrot.lane.b32.xlu0 %v480, 56
        %v993 = vpop.permute.xlu0 %992
        %994 = vrot.lane.b32.xlu0 %v481, 56
        %v995 = vpop.permute.xlu0 %994
        %vm996 = vcmask 457728
        %v997 = vsel %vm996, %v965, %v967
        %v998 = vsel %vm996, %v967, %v969
        %v999 = vsel %vm996, %v969, %v971
        %v1000 = vsel %vm996, %v973, %v975
        %v1001 = vsel %vm996, %v975, %v977
        %v1002 = vsel %vm996, %v977, %v979
        %v1003 = vsel %vm996, %v981, %v983
        %v1004 = vsel %vm996, %v983, %v985
        %v1005 = vsel %vm996, %v985, %v987
        %v1006 = vsel %vm996, %v989, %v991
        %v1007 = vsel %vm996, %v991, %v993
        %v1008 = vsel %vm996, %v993, %v995
        %vm1021 = vcmask 457728
        %v1024 = vsel %vm1021, %v971, %v965
        %v1028 = vsel %vm1021, %v979, %v973
        %v1032 = vsel %vm1021, %v987, %v981
        %v1036 = vsel %vm1021, %v995, %v989
        %1038 = vst [vmem:[#allocation2 + $0x300] sm:$0xff] %v997
        %1039 = vst [vmem:[#allocation2 + $0x308] sm:$0xff] %v998
        %1040 = vst [vmem:[#allocation2 + $0x310] sm:$0xff] %v999
        %1041 = vst [vmem:[#allocation2 + $0x318] sm:$0xff] %v1024
        %1042 = vst [vmem:[#allocation2 + $0x320] sm:$0xff] %v1000
        %1043 = vst [vmem:[#allocation2 + $0x328] sm:$0xff] %v1001
        %1044 = vst [vmem:[#allocation2 + $0x330] sm:$0xff] %v1002
        %1045 = vst [vmem:[#allocation2 + $0x338] sm:$0xff] %v1028
        %1046 = vst [vmem:[#allocation2 + $0x340] sm:$0xff] %v1003
        %1047 = vst [vmem:[#allocation2 + $0x348] sm:$0xff] %v1004
        %1048 = vst [vmem:[#allocation2 + $0x350] sm:$0xff] %v1005
        %1049 = vst [vmem:[#allocation2 + $0x358] sm:$0xff] %v1032
        %1050 = vst [vmem:[#allocation2 + $0x360] sm:$0xff] %v1006
        %1051 = vst [vmem:[#allocation2 + $0x368] sm:$0xff] %v1007
        %1052 = vst [vmem:[#allocation2 + $0x370] sm:$0xff] %v1008
        %1053 = vst [vmem:[#allocation2 + $0x378] sm:$0xff] %v1036
        %1054 = vrot.lane.b32.xlu0 %v466, 55
        %v1055 = vpop.permute.xlu0 %1054
        %1056 = vrot.lane.b32.xlu0 %v467, 55
        %v1057 = vpop.permute.xlu0 %1056
        %1058 = vrot.lane.b32.xlu0 %v468, 55
        %v1059 = vpop.permute.xlu0 %1058
        %1060 = vrot.lane.b32.xlu0 %v469, 55
        %v1061 = vpop.permute.xlu0 %1060
        %1062 = vrot.lane.b32.xlu0 %v470, 55
        %v1063 = vpop.permute.xlu0 %1062
        %1064 = vrot.lane.b32.xlu0 %v471, 55
        %v1065 = vpop.permute.xlu0 %1064
        %1066 = vrot.lane.b32.xlu0 %v472, 55
        %v1067 = vpop.permute.xlu0 %1066
        %1068 = vrot.lane.b32.xlu0 %v473, 55
        %v1069 = vpop.permute.xlu0 %1068
        %1070 = vrot.lane.b32.xlu0 %v474, 55
        %v1071 = vpop.permute.xlu0 %1070
        %1072 = vrot.lane.b32.xlu0 %v475, 55
        %v1073 = vpop.permute.xlu0 %1072
        %1074 = vrot.lane.b32.xlu0 %v476, 55
        %v1075 = vpop.permute.xlu0 %1074
        %1076 = vrot.lane.b32.xlu0 %v477, 55
        %v1077 = vpop.permute.xlu0 %1076
        %1078 = vrot.lane.b32.xlu0 %v478, 55
        %v1079 = vpop.permute.xlu0 %1078
        %1080 = vrot.lane.b32.xlu0 %v479, 55
        %v1081 = vpop.permute.xlu0 %1080
        %1082 = vrot.lane.b32.xlu0 %v480, 55
        %v1083 = vpop.permute.xlu0 %1082
        %1084 = vrot.lane.b32.xlu0 %v481, 55
        %v1085 = vpop.permute.xlu0 %1084
        %vm1086 = vcmask 449536
        %v1087 = vsel %vm1086, %v1055, %v1057
        %v1088 = vsel %vm1086, %v1057, %v1059
        %v1089 = vsel %vm1086, %v1059, %v1061
        %v1090 = vsel %vm1086, %v1063, %v1065
        %v1091 = vsel %vm1086, %v1065, %v1067
        %v1092 = vsel %vm1086, %v1067, %v1069
        %v1093 = vsel %vm1086, %v1071, %v1073
        %v1094 = vsel %vm1086, %v1073, %v1075
        %v1095 = vsel %vm1086, %v1075, %v1077
        %v1096 = vsel %vm1086, %v1079, %v1081
        %v1097 = vsel %vm1086, %v1081, %v1083
        %v1098 = vsel %vm1086, %v1083, %v1085
        %vm1111 = vcmask 449536
        %v1114 = vsel %vm1111, %v1061, %v1055
        %v1118 = vsel %vm1111, %v1069, %v1063
        %v1122 = vsel %vm1111, %v1077, %v1071
        %v1126 = vsel %vm1111, %v1085, %v1079
        %1128 = vst [vmem:[#allocation2 + $0x380] sm:$0xff] %v1087
        %1129 = vst [vmem:[#allocation2 + $0x388] sm:$0xff] %v1088
        %1130 = vst [vmem:[#allocation2 + $0x390] sm:$0xff] %v1089
        %1131 = vst [vmem:[#allocation2 + $0x398] sm:$0xff] %v1114
        %1132 = vst [vmem:[#allocation2 + $0x3a0] sm:$0xff] %v1090
        %1133 = vst [vmem:[#allocation2 + $0x3a8] sm:$0xff] %v1091
        %1134 = vst [vmem:[#allocation2 + $0x3b0] sm:$0xff] %v1092
        %1135 = vst [vmem:[#allocation2 + $0x3b8] sm:$0xff] %v1118
        %1136 = vst [vmem:[#allocation2 + $0x3c0] sm:$0xff] %v1093
        %1137 = vst [vmem:[#allocation2 + $0x3c8] sm:$0xff] %v1094
        %1138 = vst [vmem:[#allocation2 + $0x3d0] sm:$0xff] %v1095
        %1139 = vst [vmem:[#allocation2 + $0x3d8] sm:$0xff] %v1122
        %1140 = vst [vmem:[#allocation2 + $0x3e0] sm:$0xff] %v1096
        %1141 = vst [vmem:[#allocation2 + $0x3e8] sm:$0xff] %v1097
        %1142 = vst [vmem:[#allocation2 + $0x3f0] sm:$0xff] %v1098
        %1143 = vst [vmem:[#allocation2 + $0x3f8] sm:$0xff] %v1126
        %v1144 = vld [vmem:[%s3] sm:$0xff]
        %v1145 = vld [vmem:[%s3 + $0x8] sm:$0xff]
        %v1146 = vld [vmem:[%s3 + $0x10] sm:$0xff]
        %v1147 = vld [vmem:[%s3 + $0x18] sm:$0xff]
        %v1148 = vld [vmem:[%s3 + $0x20] sm:$0xff]
        %v1149 = vld [vmem:[%s3 + $0x28] sm:$0xff]
        %v1150 = vld [vmem:[%s3 + $0x30] sm:$0xff]
        %v1151 = vld [vmem:[%s3 + $0x38] sm:$0xff]
        %v1152 = vld [vmem:[%s3 + $0x40] sm:$0xff]
        %v1153 = vld [vmem:[%s3 + $0x48] sm:$0xff]
        %v1154 = vld [vmem:[%s3 + $0x50] sm:$0xff]
        %v1155 = vld [vmem:[%s3 + $0x58] sm:$0xff]
        %v1156 = vld [vmem:[%s3 + $0x60] sm:$0xff]
        %v1157 = vld [vmem:[%s3 + $0x68] sm:$0xff]
        %v1158 = vld [vmem:[%s3 + $0x70] sm:$0xff]
        %v1159 = vld [vmem:[%s3 + $0x78] sm:$0xff]
        %v1160 = vld [vmem:[%s3 + $0x80] sm:$0xff]
        %v1161 = vld [vmem:[%s3 + $0x88] sm:$0xff]
        %v1162 = vld [vmem:[%s3 + $0x90] sm:$0xff]
        %v1163 = vld [vmem:[%s3 + $0x98] sm:$0xff]
        %v1164 = vld [vmem:[%s3 + $0xa0] sm:$0xff]
        %v1165 = vld [vmem:[%s3 + $0xa8] sm:$0xff]
        %v1166 = vld [vmem:[%s3 + $0xb0] sm:$0xff]
        %v1167 = vld [vmem:[%s3 + $0xb8] sm:$0xff]
        %v1168 = vld [vmem:[%s3 + $0xc0] sm:$0xff]
        %v1169 = vld [vmem:[%s3 + $0xc8] sm:$0xff]
        %v1170 = vld [vmem:[%s3 + $0xd0] sm:$0xff]
        %v1171 = vld [vmem:[%s3 + $0xd8] sm:$0xff]
        %v1172 = vld [vmem:[%s3 + $0xe0] sm:$0xff]
        %v1173 = vld [vmem:[%s3 + $0xe8] sm:$0xff]
        %v1174 = vld [vmem:[%s3 + $0xf0] sm:$0xff]
        %v1175 = vld [vmem:[%s3 + $0xf8] sm:$0xff]
        %v1176 = vld [vmem:[#allocation2] sm:$0xff]
        %v1177 = vld [vmem:[#allocation2 + $0x8] sm:$0xff]
        %v1178 = vld [vmem:[#allocation2 + $0x10] sm:$0xff]
        %v1179 = vld [vmem:[#allocation2 + $0x18] sm:$0xff]
        %v1180 = vld [vmem:[#allocation2 + $0x20] sm:$0xff]
        %v1181 = vld [vmem:[#allocation2 + $0x28] sm:$0xff]
        %v1182 = vld [vmem:[#allocation2 + $0x30] sm:$0xff]
        %v1183 = vld [vmem:[#allocation2 + $0x38] sm:$0xff]
        %v1184 = vld [vmem:[#allocation2 + $0x40] sm:$0xff]
        %v1185 = vld [vmem:[#allocation2 + $0x48] sm:$0xff]
        %v1186 = vld [vmem:[#allocation2 + $0x50] sm:$0xff]
        %v1187 = vld [vmem:[#allocation2 + $0x58] sm:$0xff]
        %v1188 = vld [vmem:[#allocation2 + $0x60] sm:$0xff]
        %v1189 = vld [vmem:[#allocation2 + $0x68] sm:$0xff]
        %v1190 = vld [vmem:[#allocation2 + $0x70] sm:$0xff]
        %v1191 = vld [vmem:[#allocation2 + $0x78] sm:$0xff]
        %v1192 = vld [vmem:[#allocation2 + $0x80] sm:$0xff]
        %v1193 = vld [vmem:[#allocation2 + $0x88] sm:$0xff]
        %v1194 = vld [vmem:[#allocation2 + $0x90] sm:$0xff]
        %v1195 = vld [vmem:[#allocation2 + $0x98] sm:$0xff]
        %v1196 = vld [vmem:[#allocation2 + $0xa0] sm:$0xff]
        %v1197 = vld [vmem:[#allocation2 + $0xa8] sm:$0xff]
        %v1198 = vld [vmem:[#allocation2 + $0xb0] sm:$0xff]
        %v1199 = vld [vmem:[#allocation2 + $0xb8] sm:$0xff]
        %v1200 = vld [vmem:[#allocation2 + $0xc0] sm:$0xff]
        %v1201 = vld [vmem:[#allocation2 + $0xc8] sm:$0xff]
        %v1202 = vld [vmem:[#allocation2 + $0xd0] sm:$0xff]
        %v1203 = vld [vmem:[#allocation2 + $0xd8] sm:$0xff]
        %v1204 = vld [vmem:[#allocation2 + $0xe0] sm:$0xff]
        %v1205 = vld [vmem:[#allocation2 + $0xe8] sm:$0xff]
        %v1206 = vld [vmem:[#allocation2 + $0xf0] sm:$0xff]
        %v1207 = vld [vmem:[#allocation2 + $0xf8] sm:$0xff]
        %v1208 = vld [vmem:[#allocation2 + $0x100] sm:$0xff]
        %v1209 = vld [vmem:[#allocation2 + $0x108] sm:$0xff]
        %v1210 = vld [vmem:[#allocation2 + $0x110] sm:$0xff]
        %v1211 = vld [vmem:[#allocation2 + $0x118] sm:$0xff]
        %v1212 = vld [vmem:[#allocation2 + $0x120] sm:$0xff]
        %v1213 = vld [vmem:[#allocation2 + $0x128] sm:$0xff]
        %v1214 = vld [vmem:[#allocation2 + $0x130] sm:$0xff]
        %v1215 = vld [vmem:[#allocation2 + $0x138] sm:$0xff]
        %v1216 = vld [vmem:[#allocation2 + $0x140] sm:$0xff]
        %v1217 = vld [vmem:[#allocation2 + $0x148] sm:$0xff]
        %v1218 = vld [vmem:[#allocation2 + $0x150] sm:$0xff]
        %v1219 = vld [vmem:[#allocation2 + $0x158] sm:$0xff]
        %v1220 = vld [vmem:[#allocation2 + $0x160] sm:$0xff]
        %v1221 = vld [vmem:[#allocation2 + $0x168] sm:$0xff]
        %v1222 = vld [vmem:[#allocation2 + $0x170] sm:$0xff]
        %v1223 = vld [vmem:[#allocation2 + $0x178] sm:$0xff]
        %v1224 = vld [vmem:[#allocation2 + $0x180] sm:$0xff]
        %v1225 = vld [vmem:[#allocation2 + $0x188] sm:$0xff]
        %v1226 = vld [vmem:[#allocation2 + $0x190] sm:$0xff]
        %v1227 = vld [vmem:[#allocation2 + $0x198] sm:$0xff]
        %v1228 = vld [vmem:[#allocation2 + $0x1a0] sm:$0xff]
        %v1229 = vld [vmem:[#allocation2 + $0x1a8] sm:$0xff]
        %v1230 = vld [vmem:[#allocation2 + $0x1b0] sm:$0xff]
        %v1231 = vld [vmem:[#allocation2 + $0x1b8] sm:$0xff]
        %v1232 = vld [vmem:[#allocation2 + $0x1c0] sm:$0xff]
        %v1233 = vld [vmem:[#allocation2 + $0x1c8] sm:$0xff]
        %v1234 = vld [vmem:[#allocation2 + $0x1d0] sm:$0xff]
        %v1235 = vld [vmem:[#allocation2 + $0x1d8] sm:$0xff]
        %v1236 = vld [vmem:[#allocation2 + $0x1e0] sm:$0xff]
        %v1237 = vld [vmem:[#allocation2 + $0x1e8] sm:$0xff]
        %v1238 = vld [vmem:[#allocation2 + $0x1f0] sm:$0xff]
        %v1239 = vld [vmem:[#allocation2 + $0x1f8] sm:$0xff]
        %v1240 = vld [vmem:[#allocation2 + $0x200] sm:$0xff]
        %v1241 = vld [vmem:[#allocation2 + $0x208] sm:$0xff]
        %v1242 = vld [vmem:[#allocation2 + $0x210] sm:$0xff]
        %v1243 = vld [vmem:[#allocation2 + $0x218] sm:$0xff]
        %v1244 = vld [vmem:[#allocation2 + $0x220] sm:$0xff]
        %v1245 = vld [vmem:[#allocation2 + $0x228] sm:$0xff]
        %v1246 = vld [vmem:[#allocation2 + $0x230] sm:$0xff]
        %v1247 = vld [vmem:[#allocation2 + $0x238] sm:$0xff]
        %v1248 = vld [vmem:[#allocation2 + $0x240] sm:$0xff]
        %v1249 = vld [vmem:[#allocation2 + $0x248] sm:$0xff]
        %v1250 = vld [vmem:[#allocation2 + $0x250] sm:$0xff]
        %v1251 = vld [vmem:[#allocation2 + $0x258] sm:$0xff]
        %v1252 = vld [vmem:[#allocation2 + $0x260] sm:$0xff]
        %v1253 = vld [vmem:[#allocation2 + $0x268] sm:$0xff]
        %v1254 = vld [vmem:[#allocation2 + $0x270] sm:$0xff]
        %v1255 = vld [vmem:[#allocation2 + $0x278] sm:$0xff]
        %v1256 = vld [vmem:[#allocation2 + $0x280] sm:$0xff]
        %v1257 = vld [vmem:[#allocation2 + $0x288] sm:$0xff]
        %v1258 = vld [vmem:[#allocation2 + $0x290] sm:$0xff]
        %v1259 = vld [vmem:[#allocation2 + $0x298] sm:$0xff]
        %v1260 = vld [vmem:[#allocation2 + $0x2a0] sm:$0xff]
        %v1261 = vld [vmem:[#allocation2 + $0x2a8] sm:$0xff]
        %v1262 = vld [vmem:[#allocation2 + $0x2b0] sm:$0xff]
        %v1263 = vld [vmem:[#allocation2 + $0x2b8] sm:$0xff]
        %v1264 = vld [vmem:[#allocation2 + $0x2c0] sm:$0xff]
        %v1265 = vld [vmem:[#allocation2 + $0x2c8] sm:$0xff]
        %v1266 = vld [vmem:[#allocation2 + $0x2d0] sm:$0xff]
        %v1267 = vld [vmem:[#allocation2 + $0x2d8] sm:$0xff]
        %v1268 = vld [vmem:[#allocation2 + $0x2e0] sm:$0xff]
        %v1269 = vld [vmem:[#allocation2 + $0x2e8] sm:$0xff]
        %v1270 = vld [vmem:[#allocation2 + $0x2f0] sm:$0xff]
        %v1271 = vld [vmem:[#allocation2 + $0x2f8] sm:$0xff]
        %v1272 = vld [vmem:[#allocation2 + $0x300] sm:$0xff]
        %v1273 = vld [vmem:[#allocation2 + $0x308] sm:$0xff]
        %v1274 = vld [vmem:[#allocation2 + $0x310] sm:$0xff]
        %v1275 = vld [vmem:[#allocation2 + $0x318] sm:$0xff]
        %v1276 = vld [vmem:[#allocation2 + $0x320] sm:$0xff]
        %v1277 = vld [vmem:[#allocation2 + $0x328] sm:$0xff]
        %v1278 = vld [vmem:[#allocation2 + $0x330] sm:$0xff]
        %v1279 = vld [vmem:[#allocation2 + $0x338] sm:$0xff]
        %v1280 = vld [vmem:[#allocation2 + $0x340] sm:$0xff]
        %v1281 = vld [vmem:[#allocation2 + $0x348] sm:$0xff]
        %v1282 = vld [vmem:[#allocation2 + $0x350] sm:$0xff]
        %v1283 = vld [vmem:[#allocation2 + $0x358] sm:$0xff]
        %v1284 = vld [vmem:[#allocation2 + $0x360] sm:$0xff]
        %v1285 = vld [vmem:[#allocation2 + $0x368] sm:$0xff]
        %v1286 = vld [vmem:[#allocation2 + $0x370] sm:$0xff]
        %v1287 = vld [vmem:[#allocation2 + $0x378] sm:$0xff]
        %v1288 = vld [vmem:[#allocation2 + $0x380] sm:$0xff]
        %v1289 = vld [vmem:[#allocation2 + $0x388] sm:$0xff]
        %v1290 = vld [vmem:[#allocation2 + $0x390] sm:$0xff]
        %v1291 = vld [vmem:[#allocation2 + $0x398] sm:$0xff]
        %v1292 = vld [vmem:[#allocation2 + $0x3a0] sm:$0xff]
        %v1293 = vld [vmem:[#allocation2 + $0x3a8] sm:$0xff]
        %v1294 = vld [vmem:[#allocation2 + $0x3b0] sm:$0xff]
        %v1295 = vld [vmem:[#allocation2 + $0x3b8] sm:$0xff]
        %v1296 = vld [vmem:[#allocation2 + $0x3c0] sm:$0xff]
        %v1297 = vld [vmem:[#allocation2 + $0x3c8] sm:$0xff]
        %v1298 = vld [vmem:[#allocation2 + $0x3d0] sm:$0xff]
        %v1299 = vld [vmem:[#allocation2 + $0x3d8] sm:$0xff]
        %v1300 = vld [vmem:[#allocation2 + $0x3e0] sm:$0xff]
        %v1301 = vld [vmem:[#allocation2 + $0x3e8] sm:$0xff]
        %v1302 = vld [vmem:[#allocation2 + $0x3f0] sm:$0xff]
        %v1303 = vld [vmem:[#allocation2 + $0x3f8] sm:$0xff]
        %v1304 = vld [vmem:[%s4] sm:$0xff]
        %v1305 = vld [vmem:[%s4 + $0x8] sm:$0xff]
        %v1306 = vld [vmem:[%s4 + $0x10] sm:$0xff]
        %v1307 = vld [vmem:[%s4 + $0x18] sm:$0xff]
        %v1308 = vld [vmem:[%s4 + $0x20] sm:$0xff]
        %v1309 = vld [vmem:[%s4 + $0x28] sm:$0xff]
        %v1310 = vld [vmem:[%s4 + $0x30] sm:$0xff]
        %v1311 = vld [vmem:[%s4 + $0x38] sm:$0xff]
        %v1312 = vld [vmem:[%s4 + $0x40] sm:$0xff]
        %v1313 = vld [vmem:[%s4 + $0x48] sm:$0xff]
        %v1314 = vld [vmem:[%s4 + $0x50] sm:$0xff]
        %v1315 = vld [vmem:[%s4 + $0x58] sm:$0xff]
        %v1316 = vld [vmem:[%s4 + $0x60] sm:$0xff]
        %v1317 = vld [vmem:[%s4 + $0x68] sm:$0xff]
        %v1318 = vld [vmem:[%s4 + $0x70] sm:$0xff]
        %v1319 = vld [vmem:[%s4 + $0x78] sm:$0xff]
        %1321 = vset.pattern.permute.xlu0 0
        %1322 = vperm.xlu0 %1321, %v1304
        %v1323 = vpop.permute.xlu0 %1322
        %1326 = vset.pattern.permute.xlu0 0
        %1327 = vperm.xlu0 %1326, %v1305
        %v1328 = vpop.permute.xlu0 %1327
        %1331 = vset.pattern.permute.xlu0 0
        %1332 = vperm.xlu0 %1331, %v1306
        %v1333 = vpop.permute.xlu0 %1332
        %1336 = vset.pattern.permute.xlu0 0
        %1337 = vperm.xlu0 %1336, %v1307
        %v1338 = vpop.permute.xlu0 %1337
        %1341 = vset.pattern.permute.xlu0 0
        %1342 = vperm.xlu0 %1341, %v1308
        %v1343 = vpop.permute.xlu0 %1342
        %1346 = vset.pattern.permute.xlu0 0
        %1347 = vperm.xlu0 %1346, %v1309
        %v1348 = vpop.permute.xlu0 %1347
        %1351 = vset.pattern.permute.xlu0 0
        %1352 = vperm.xlu0 %1351, %v1310
        %v1353 = vpop.permute.xlu0 %1352
        %1356 = vset.pattern.permute.xlu0 0
        %1357 = vperm.xlu0 %1356, %v1311
        %v1358 = vpop.permute.xlu0 %1357
        %1361 = vset.pattern.permute.xlu0 0
        %1362 = vperm.xlu0 %1361, %v1312
        %v1363 = vpop.permute.xlu0 %1362
        %1366 = vset.pattern.permute.xlu0 0
        %1367 = vperm.xlu0 %1366, %v1313
        %v1368 = vpop.permute.xlu0 %1367
        %1371 = vset.pattern.permute.xlu0 0
        %1372 = vperm.xlu0 %1371, %v1314
        %v1373 = vpop.permute.xlu0 %1372
        %1376 = vset.pattern.permute.xlu0 0
        %1377 = vperm.xlu0 %1376, %v1315
        %v1378 = vpop.permute.xlu0 %1377
        %1381 = vset.pattern.permute.xlu0 0
        %1382 = vperm.xlu0 %1381, %v1316
        %v1383 = vpop.permute.xlu0 %1382
        %1386 = vset.pattern.permute.xlu0 0
        %1387 = vperm.xlu0 %1386, %v1317
        %v1388 = vpop.permute.xlu0 %1387
        %1391 = vset.pattern.permute.xlu0 0
        %1392 = vperm.xlu0 %1391, %v1318
        %v1393 = vpop.permute.xlu0 %1392
        %1396 = vset.pattern.permute.xlu0 0
        %1397 = vperm.xlu0 %1396, %v1319
        %v1398 = vpop.permute.xlu0 %1397
        %v1432 = vunpack.c.l.b16 %v1144
        %v1433 = vunpack.c.h.b16 %v1144
        %v1434 = vunpack.c.l.b16 %v1145
        %v1435 = vunpack.c.h.b16 %v1145
        %v1436 = vunpack.c.l.b16 %v1146
        %v1437 = vunpack.c.h.b16 %v1146
        %v1438 = vunpack.c.l.b16 %v1147
        %v1439 = vunpack.c.h.b16 %v1147
        %v1440 = vunpack.c.l.b16 %v1148
        %v1441 = vunpack.c.h.b16 %v1148
        %v1442 = vunpack.c.l.b16 %v1149
        %v1443 = vunpack.c.h.b16 %v1149
        %v1444 = vunpack.c.l.b16 %v1150
        %v1445 = vunpack.c.h.b16 %v1150
        %v1446 = vunpack.c.l.b16 %v1151
        %v1447 = vunpack.c.h.b16 %v1151
        %v1448 = vunpack.c.l.b16 %v1152
        %v1449 = vunpack.c.h.b16 %v1152
        %v1450 = vunpack.c.l.b16 %v1153
        %v1451 = vunpack.c.h.b16 %v1153
        %v1452 = vunpack.c.l.b16 %v1154
        %v1453 = vunpack.c.h.b16 %v1154
        %v1454 = vunpack.c.l.b16 %v1155
        %v1455 = vunpack.c.h.b16 %v1155
        %v1456 = vunpack.c.l.b16 %v1156
        %v1457 = vunpack.c.h.b16 %v1156
        %v1458 = vunpack.c.l.b16 %v1157
        %v1459 = vunpack.c.h.b16 %v1157
        %v1460 = vunpack.c.l.b16 %v1158
        %v1461 = vunpack.c.h.b16 %v1158
        %v1462 = vunpack.c.l.b16 %v1159
        %v1463 = vunpack.c.h.b16 %v1159
        %v1464 = vunpack.c.l.b16 %v1160
        %v1465 = vunpack.c.h.b16 %v1160
        %v1466 = vunpack.c.l.b16 %v1161
        %v1467 = vunpack.c.h.b16 %v1161
        %v1468 = vunpack.c.l.b16 %v1162
        %v1469 = vunpack.c.h.b16 %v1162
        %v1470 = vunpack.c.l.b16 %v1163
        %v1471 = vunpack.c.h.b16 %v1163
        %v1472 = vunpack.c.l.b16 %v1164
        %v1473 = vunpack.c.h.b16 %v1164
        %v1474 = vunpack.c.l.b16 %v1165
        %v1475 = vunpack.c.h.b16 %v1165
        %v1476 = vunpack.c.l.b16 %v1166
        %v1477 = vunpack.c.h.b16 %v1166
        %v1478 = vunpack.c.l.b16 %v1167
        %v1479 = vunpack.c.h.b16 %v1167
        %v1480 = vunpack.c.l.b16 %v1168
        %v1481 = vunpack.c.h.b16 %v1168
        %v1482 = vunpack.c.l.b16 %v1169
        %v1483 = vunpack.c.h.b16 %v1169
        %v1484 = vunpack.c.l.b16 %v1170
        %v1485 = vunpack.c.h.b16 %v1170
        %v1486 = vunpack.c.l.b16 %v1171
        %v1487 = vunpack.c.h.b16 %v1171
        %v1488 = vunpack.c.l.b16 %v1172
        %v1489 = vunpack.c.h.b16 %v1172
        %v1490 = vunpack.c.l.b16 %v1173
        %v1491 = vunpack.c.h.b16 %v1173
        %v1492 = vunpack.c.l.b16 %v1174
        %v1493 = vunpack.c.h.b16 %v1174
        %v1494 = vunpack.c.l.b16 %v1175
        %v1495 = vunpack.c.h.b16 %v1175
        %v1496 = vpack.c.b16 %v1436, %v1432
        %v1497 = vpack.c.b16 %v1437, %v1433
        %v1498 = vpack.c.b16 %v1438, %v1434
        %v1499 = vpack.c.b16 %v1439, %v1435
        %v1500 = vpack.c.b16 %v1444, %v1440
        %v1501 = vpack.c.b16 %v1445, %v1441
        %v1502 = vpack.c.b16 %v1446, %v1442
        %v1503 = vpack.c.b16 %v1447, %v1443
        %v1504 = vpack.c.b16 %v1452, %v1448
        %v1505 = vpack.c.b16 %v1453, %v1449
        %v1506 = vpack.c.b16 %v1454, %v1450
        %v1507 = vpack.c.b16 %v1455, %v1451
        %v1508 = vpack.c.b16 %v1460, %v1456
        %v1509 = vpack.c.b16 %v1461, %v1457
        %v1510 = vpack.c.b16 %v1462, %v1458
        %v1511 = vpack.c.b16 %v1463, %v1459
        %v1512 = vpack.c.b16 %v1468, %v1464
        %v1513 = vpack.c.b16 %v1469, %v1465
        %v1514 = vpack.c.b16 %v1470, %v1466
        %v1515 = vpack.c.b16 %v1471, %v1467
        %v1516 = vpack.c.b16 %v1476, %v1472
        %v1517 = vpack.c.b16 %v1477, %v1473
        %v1518 = vpack.c.b16 %v1478, %v1474
        %v1519 = vpack.c.b16 %v1479, %v1475
        %v1520 = vpack.c.b16 %v1484, %v1480
        %v1521 = vpack.c.b16 %v1485, %v1481
        %v1522 = vpack.c.b16 %v1486, %v1482
        %v1523 = vpack.c.b16 %v1487, %v1483
        %v1524 = vpack.c.b16 %v1492, %v1488
        %v1525 = vpack.c.b16 %v1493, %v1489
        %v1526 = vpack.c.b16 %v1494, %v1490
        %v1527 = vpack.c.b16 %v1495, %v1491
        %1560 = vmatprep.subr.bf16.mxu0 %v1177
        %1561 = vmatpush1.bf16.msra.mxu0 %v1176
        %1562 = vmatprep.subr.bf16.mxu0 %v1181
        %1563 = vmatpush1.bf16.msra.mxu0 %v1180
        %1564 = vmatprep.subr.bf16.mxu0 %v1185
        %1565 = vmatpush1.bf16.msra.mxu0 %v1184
        %1566 = vmatprep.subr.bf16.mxu0 %v1189
        %1567 = vmatpush1.bf16.msra.mxu0 %v1188
        %1568 = vmatprep.subr.bf16.mxu0 %v1193
        %1569 = vmatpush1.bf16.msra.mxu0 %v1192
        %1570 = vmatprep.subr.bf16.mxu0 %v1197
        %1571 = vmatpush1.bf16.msra.mxu0 %v1196
        %1572 = vmatprep.subr.bf16.mxu0 %v1201
        %1573 = vmatpush1.bf16.msra.mxu0 %v1200
        %1574 = vmatprep.subr.bf16.mxu0 %v1205
        %1575 = vmatpush1.bf16.msra.mxu0 %v1204
        %1576 = vmatprep.subr.bf16.mxu0 %v1209
        %1577 = vmatpush1.bf16.msra.mxu0 %v1208
        %1578 = vmatprep.subr.bf16.mxu0 %v1213
        %1579 = vmatpush1.bf16.msra.mxu0 %v1212
        %1580 = vmatprep.subr.bf16.mxu0 %v1217
        %1581 = vmatpush1.bf16.msra.mxu0 %v1216
        %1582 = vmatprep.subr.bf16.mxu0 %v1221
        %1583 = vmatpush1.bf16.msra.mxu0 %v1220
        %1584 = vmatprep.subr.bf16.mxu0 %v1225
        %1585 = vmatpush1.bf16.msra.mxu0 %v1224
        %1586 = vmatprep.subr.bf16.mxu0 %v1229
        %1587 = vmatpush1.bf16.msra.mxu0 %v1228
        %1588 = vmatprep.subr.bf16.mxu0 %v1233
        %1589 = vmatpush1.bf16.msra.mxu0 %v1232
        %1590 = vmatprep.subr.bf16.mxu0 %v1237
        %1591 = vmatpush1.bf16.msra.mxu0 %v1236
        %1592 = vmatprep.mubr.bf16.mxu0 %v1497
        %1593 = vmatmul.mubr.bf16.gmra.mrb[0].mxu0 %v1496
        %v1594 = vpop.f32.mrb[0].mxu0
        %v1595 = vadd.f32 %v1323, %v1594
        %v1596 = vpop.f32.mrb[0].mxu0
        %v1597 = vadd.f32 %v1323, %v1596
        %v1598 = vpop.f32.mrb[0].mxu0
        %v1599 = vadd.f32 %v1328, %v1598
        %v1600 = vpop.f32.mrb[0].mxu0
        %v1601 = vadd.f32 %v1328, %v1600
        %1602 = vmatprep.mubr.bf16.mxu0 %v1501
        %1603 = vmatmul.mubr.bf16.gmra.mrb[0].mxu0 %v1500
        %v1604 = vpop.f32.mrb[0].mxu0
        %v1605 = vadd.f32 %v1333, %v1604
        %v1606 = vpop.f32.mrb[0].mxu0
        %v1607 = vadd.f32 %v1333, %v1606
        %v1608 = vpop.f32.mrb[0].mxu0
        %v1609 = vadd.f32 %v1338, %v1608
        %v1610 = vpop.f32.mrb[0].mxu0
        %v1611 = vadd.f32 %v1338, %v1610
        %1612 = vmatprep.mubr.bf16.mxu0 %v1505
        %1613 = vmatmul.mubr.bf16.gmra.mrb[0].mxu0 %v1504
        %v1614 = vpop.f32.mrb[0].mxu0
        %v1615 = vadd.f32 %v1343, %v1614
        %v1616 = vpop.f32.mrb[0].mxu0
        %v1617 = vadd.f32 %v1343, %v1616
        %v1618 = vpop.f32.mrb[0].mxu0
        %v1619 = vadd.f32 %v1348, %v1618
        %v1620 = vpop.f32.mrb[0].mxu0
        %v1621 = vadd.f32 %v1348, %v1620
        %1622 = vmatprep.mubr.bf16.mxu0 %v1509
        %1623 = vmatmul.mubr.bf16.gmra.mrb[0].mxu0 %v1508
        %v1624 = vpop.f32.mrb[0].mxu0
        %v1625 = vadd.f32 %v1353, %v1624
        %v1626 = vpop.f32.mrb[0].mxu0
        %v1627 = vadd.f32 %v1353, %v1626
        %v1628 = vpop.f32.mrb[0].mxu0
        %v1629 = vadd.f32 %v1358, %v1628
        %v1630 = vpop.f32.mrb[0].mxu0
        %v1631 = vadd.f32 %v1358, %v1630
        %1632 = vmatprep.mubr.bf16.mxu0 %v1513
        %1633 = vmatmul.mubr.bf16.gmra.mrb[0].mxu0 %v1512
        %v1634 = vpop.f32.mrb[0].mxu0
        %v1635 = vadd.f32 %v1363, %v1634
        %v1636 = vpop.f32.mrb[0].mxu0
        %v1637 = vadd.f32 %v1363, %v1636
        %v1638 = vpop.f32.mrb[0].mxu0
        %v1639 = vadd.f32 %v1368, %v1638
        %v1640 = vpop.f32.mrb[0].mxu0
        %v1641 = vadd.f32 %v1368, %v1640
        %1642 = vmatprep.mubr.bf16.mxu0 %v1517
        %1643 = vmatmul.mubr.bf16.gmra.mrb[0].mxu0 %v1516
        %v1644 = vpop.f32.mrb[0].mxu0
        %v1645 = vadd.f32 %v1373, %v1644
        %v1646 = vpop.f32.mrb[0].mxu0
        %v1647 = vadd.f32 %v1373, %v1646
        %v1648 = vpop.f32.mrb[0].mxu0
        %v1649 = vadd.f32 %v1378, %v1648
        %v1650 = vpop.f32.mrb[0].mxu0
        %v1651 = vadd.f32 %v1378, %v1650
        %1652 = vmatprep.mubr.bf16.mxu0 %v1521
        %1653 = vmatmul.mubr.bf16.gmra.mrb[0].mxu0 %v1520
        %v1654 = vpop.f32.mrb[0].mxu0
        %v1655 = vadd.f32 %v1383, %v1654
        %v1656 = vpop.f32.mrb[0].mxu0
        %v1657 = vadd.f32 %v1383, %v1656
        %v1658 = vpop.f32.mrb[0].mxu0
        %v1659 = vadd.f32 %v1388, %v1658
        %v1660 = vpop.f32.mrb[0].mxu0
        %v1661 = vadd.f32 %v1388, %v1660
        %1662 = vmatprep.mubr.bf16.mxu0 %v1525
        %1663 = vmatmul.mubr.bf16.gmra.mrb[0].mxu0 %v1524
        %v1664 = vpop.f32.mrb[0].mxu0
        %v1665 = vadd.f32 %v1393, %v1664
        %v1666 = vpop.f32.mrb[0].mxu0
        %v1667 = vadd.f32 %v1393, %v1666
        %v1668 = vpop.f32.mrb[0].mxu0
        %v1669 = vadd.f32 %v1398, %v1668
        %v1670 = vpop.f32.mrb[0].mxu0
        %v1671 = vadd.f32 %v1398, %v1670
        %1672 = vdwg.mxu0
        %1673 = vmatprep.subr.bf16.mxu0 %v1241
        %1674 = vmatpush1.bf16.msra.mxu0 %v1240
        %1675 = vmatprep.subr.bf16.mxu0 %v1245
        %1676 = vmatpush1.bf16.msra.mxu0 %v1244
        %1677 = vmatprep.subr.bf16.mxu0 %v1249
        %1678 = vmatpush1.bf16.msra.mxu0 %v1248
        %1679 = vmatprep.subr.bf16.mxu0 %v1253
        %1680 = vmatpush1.bf16.msra.mxu0 %v1252
        %1681 = vmatprep.subr.bf16.mxu0 %v1257
        %1682 = vmatpush1.bf16.msra.mxu0 %v1256
        %1683 = vmatprep.subr.bf16.mxu0 %v1261
        %1684 = vmatpush1.bf16.msra.mxu0 %v1260
        %1685 = vmatprep.subr.bf16.mxu0 %v1265
        %1686 = vmatpush1.bf16.msra.mxu0 %v1264
        %1687 = vmatprep.subr.bf16.mxu0 %v1269
        %1688 = vmatpush1.bf16.msra.mxu0 %v1268
        %1689 = vmatprep.subr.bf16.mxu0 %v1273
        %1690 = vmatpush1.bf16.msra.mxu0 %v1272
        %1691 = vmatprep.subr.bf16.mxu0 %v1277
        %1692 = vmatpush1.bf16.msra.mxu0 %v1276
        %1693 = vmatprep.subr.bf16.mxu0 %v1281
        %1694 = vmatpush1.bf16.msra.mxu0 %v1280
        %1695 = vmatprep.subr.bf16.mxu0 %v1285
        %1696 = vmatpush1.bf16.msra.mxu0 %v1284
        %1697 = vmatprep.subr.bf16.mxu0 %v1289
        %1698 = vmatpush1.bf16.msra.mxu0 %v1288
        %1699 = vmatprep.subr.bf16.mxu0 %v1293
        %1700 = vmatpush1.bf16.msra.mxu0 %v1292
        %1701 = vmatprep.subr.bf16.mxu0 %v1297
        %1702 = vmatpush1.bf16.msra.mxu0 %v1296
        %1703 = vmatprep.subr.bf16.mxu0 %v1301
        %1704 = vmatpush1.bf16.msra.mxu0 %v1300
        %1705 = vmatprep.mubr.bf16.mxu0 %v1499
        %1706 = vmatmul.mubr.bf16.gmra.mrb[0].mxu0 %v1498
        %v1707 = vpop.f32.mrb[0].mxu0
        %v1708 = vadd.f32 %v1595, %v1707
        %v1709 = vpop.f32.mrb[0].mxu0
        %v1710 = vadd.f32 %v1597, %v1709
        %v1711 = vpop.f32.mrb[0].mxu0
        %v1712 = vadd.f32 %v1599, %v1711
        %v1713 = vpop.f32.mrb[0].mxu0
        %v1714 = vadd.f32 %v1601, %v1713
        %1715 = vmatprep.mubr.bf16.mxu0 %v1503
        %1716 = vmatmul.mubr.bf16.gmra.mrb[0].mxu0 %v1502
        %v1717 = vpop.f32.mrb[0].mxu0
        %v1718 = vadd.f32 %v1605, %v1717
        %v1719 = vpop.f32.mrb[0].mxu0
        %v1720 = vadd.f32 %v1607, %v1719
        %v1721 = vpop.f32.mrb[0].mxu0
        %v1722 = vadd.f32 %v1609, %v1721
        %v1723 = vpop.f32.mrb[0].mxu0
        %v1724 = vadd.f32 %v1611, %v1723
        %1725 = vmatprep.mubr.bf16.mxu0 %v1507
        %1726 = vmatmul.mubr.bf16.gmra.mrb[0].mxu0 %v1506
        %v1727 = vpop.f32.mrb[0].mxu0
        %v1728 = vadd.f32 %v1615, %v1727
        %v1729 = vpop.f32.mrb[0].mxu0
        %v1730 = vadd.f32 %v1617, %v1729
        %v1731 = vpop.f32.mrb[0].mxu0
        %v1732 = vadd.f32 %v1619, %v1731
        %v1733 = vpop.f32.mrb[0].mxu0
        %v1734 = vadd.f32 %v1621, %v1733
        %1735 = vmatprep.mubr.bf16.mxu0 %v1511
        %1736 = vmatmul.mubr.bf16.gmra.mrb[0].mxu0 %v1510
        %v1737 = vpop.f32.mrb[0].mxu0
        %v1738 = vadd.f32 %v1625, %v1737
        %v1739 = vpop.f32.mrb[0].mxu0
        %v1740 = vadd.f32 %v1627, %v1739
        %v1741 = vpop.f32.mrb[0].mxu0
        %v1742 = vadd.f32 %v1629, %v1741
        %v1743 = vpop.f32.mrb[0].mxu0
        %v1744 = vadd.f32 %v1631, %v1743
        %1745 = vmatprep.mubr.bf16.mxu0 %v1515
        %1746 = vmatmul.mubr.bf16.gmra.mrb[0].mxu0 %v1514
        %v1747 = vpop.f32.mrb[0].mxu0
        %v1748 = vadd.f32 %v1635, %v1747
        %v1749 = vpop.f32.mrb[0].mxu0
        %v1750 = vadd.f32 %v1637, %v1749
        %v1751 = vpop.f32.mrb[0].mxu0
        %v1752 = vadd.f32 %v1639, %v1751
        %v1753 = vpop.f32.mrb[0].mxu0
        %v1754 = vadd.f32 %v1641, %v1753
        %1755 = vmatprep.mubr.bf16.mxu0 %v1519
        %1756 = vmatmul.mubr.bf16.gmra.mrb[0].mxu0 %v1518
        %v1757 = vpop.f32.mrb[0].mxu0
        %v1758 = vadd.f32 %v1645, %v1757
        %v1759 = vpop.f32.mrb[0].mxu0
        %v1760 = vadd.f32 %v1647, %v1759
        %v1761 = vpop.f32.mrb[0].mxu0
        %v1762 = vadd.f32 %v1649, %v1761
        %v1763 = vpop.f32.mrb[0].mxu0
        %v1764 = vadd.f32 %v1651, %v1763
        %1765 = vmatprep.mubr.bf16.mxu0 %v1523
        %1766 = vmatmul.mubr.bf16.gmra.mrb[0].mxu0 %v1522
        %v1767 = vpop.f32.mrb[0].mxu0
        %v1768 = vadd.f32 %v1655, %v1767
        %v1769 = vpop.f32.mrb[0].mxu0
        %v1770 = vadd.f32 %v1657, %v1769
        %v1771 = vpop.f32.mrb[0].mxu0
        %v1772 = vadd.f32 %v1659, %v1771
        %v1773 = vpop.f32.mrb[0].mxu0
        %v1774 = vadd.f32 %v1661, %v1773
        %1775 = vmatprep.mubr.bf16.mxu0 %v1527
        %1776 = vmatmul.mubr.bf16.gmra.mrb[0].mxu0 %v1526
        %v1777 = vpop.f32.mrb[0].mxu0
        %v1778 = vadd.f32 %v1665, %v1777
        %v1779 = vpop.f32.mrb[0].mxu0
        %v1780 = vadd.f32 %v1667, %v1779
        %v1781 = vpop.f32.mrb[0].mxu0
        %v1782 = vadd.f32 %v1669, %v1781
        %v1783 = vpop.f32.mrb[0].mxu0
        %v1784 = vadd.f32 %v1671, %v1783
        %1785 = vdwg.mxu0
        %1786 = vmatprep.subr.bf16.mxu0 %v1179
        %1787 = vmatpush1.bf16.msra.mxu0 %v1178
        %1788 = vmatprep.subr.bf16.mxu0 %v1183
        %1789 = vmatpush1.bf16.msra.mxu0 %v1182
        %1790 = vmatprep.subr.bf16.mxu0 %v1187
        %1791 = vmatpush1.bf16.msra.mxu0 %v1186
        %1792 = vmatprep.subr.bf16.mxu0 %v1191
        %1793 = vmatpush1.bf16.msra.mxu0 %v1190
        %1794 = vmatprep.subr.bf16.mxu0 %v1195
        %1795 = vmatpush1.bf16.msra.mxu0 %v1194
        %1796 = vmatprep.subr.bf16.mxu0 %v1199
        %1797 = vmatpush1.bf16.msra.mxu0 %v1198
        %1798 = vmatprep.subr.bf16.mxu0 %v1203
        %1799 = vmatpush1.bf16.msra.mxu0 %v1202
        %1800 = vmatprep.subr.bf16.mxu0 %v1207
        %1801 = vmatpush1.bf16.msra.mxu0 %v1206
        %1802 = vmatprep.subr.bf16.mxu0 %v1211
        %1803 = vmatpush1.bf16.msra.mxu0 %v1210
        %1804 = vmatprep.subr.bf16.mxu0 %v1215
        %1805 = vmatpush1.bf16.msra.mxu0 %v1214
        %1806 = vmatprep.subr.bf16.mxu0 %v1219
        %1807 = vmatpush1.bf16.msra.mxu0 %v1218
        %1808 = vmatprep.subr.bf16.mxu0 %v1223
        %1809 = vmatpush1.bf16.msra.mxu0 %v1222
        %1810 = vmatprep.subr.bf16.mxu0 %v1227
        %1811 = vmatpush1.bf16.msra.mxu0 %v1226
        %1812 = vmatprep.subr.bf16.mxu0 %v1231
        %1813 = vmatpush1.bf16.msra.mxu0 %v1230
        %1814 = vmatprep.subr.bf16.mxu0 %v1235
        %1815 = vmatpush1.bf16.msra.mxu0 %v1234
        %1816 = vmatprep.subr.bf16.mxu0 %v1239
        %1817 = vmatpush1.bf16.msra.mxu0 %v1238
        %1818 = vmatprep.mubr.bf16.mxu0 %v1497
        %1819 = vmatmul.mubr.bf16.gmra.mrb[0].mxu0 %v1496
        %v1820 = vpop.f32.mrb[0].mxu0
        %v1821 = vadd.f32 %v1323, %v1820
        %v1822 = vpop.f32.mrb[0].mxu0
        %v1823 = vadd.f32 %v1323, %v1822
        %v1824 = vpop.f32.mrb[0].mxu0
        %v1825 = vadd.f32 %v1328, %v1824
        %v1826 = vpop.f32.mrb[0].mxu0
        %v1827 = vadd.f32 %v1328, %v1826
        %1828 = vmatprep.mubr.bf16.mxu0 %v1501
        %1829 = vmatmul.mubr.bf16.gmra.mrb[0].mxu0 %v1500
        %v1830 = vpop.f32.mrb[0].mxu0
        %v1831 = vadd.f32 %v1333, %v1830
        %v1832 = vpop.f32.mrb[0].mxu0
        %v1833 = vadd.f32 %v1333, %v1832
        %v1834 = vpop.f32.mrb[0].mxu0
        %v1835 = vadd.f32 %v1338, %v1834
        %v1836 = vpop.f32.mrb[0].mxu0
        %v1837 = vadd.f32 %v1338, %v1836
        %1838 = vmatprep.mubr.bf16.mxu0 %v1505
        %1839 = vmatmul.mubr.bf16.gmra.mrb[0].mxu0 %v1504
        %v1840 = vpop.f32.mrb[0].mxu0
        %v1841 = vadd.f32 %v1343, %v1840
        %v1842 = vpop.f32.mrb[0].mxu0
        %v1843 = vadd.f32 %v1343, %v1842
        %v1844 = vpop.f32.mrb[0].mxu0
        %v1845 = vadd.f32 %v1348, %v1844
        %v1846 = vpop.f32.mrb[0].mxu0
        %v1847 = vadd.f32 %v1348, %v1846
        %1848 = vmatprep.mubr.bf16.mxu0 %v1509
        %1849 = vmatmul.mubr.bf16.gmra.mrb[0].mxu0 %v1508
        %v1850 = vpop.f32.mrb[0].mxu0
        %v1851 = vadd.f32 %v1353, %v1850
        %v1852 = vpop.f32.mrb[0].mxu0
        %v1853 = vadd.f32 %v1353, %v1852
        %v1854 = vpop.f32.mrb[0].mxu0
        %v1855 = vadd.f32 %v1358, %v1854
        %v1856 = vpop.f32.mrb[0].mxu0
        %v1857 = vadd.f32 %v1358, %v1856
        %1858 = vmatprep.mubr.bf16.mxu0 %v1513
        %1859 = vmatmul.mubr.bf16.gmra.mrb[0].mxu0 %v1512
        %v1860 = vpop.f32.mrb[0].mxu0
        %v1861 = vadd.f32 %v1363, %v1860
        %v1862 = vpop.f32.mrb[0].mxu0
        %v1863 = vadd.f32 %v1363, %v1862
        %v1864 = vpop.f32.mrb[0].mxu0
        %v1865 = vadd.f32 %v1368, %v1864
        %v1866 = vpop.f32.mrb[0].mxu0
        %v1867 = vadd.f32 %v1368, %v1866
        %1868 = vmatprep.mubr.bf16.mxu0 %v1517
        %1869 = vmatmul.mubr.bf16.gmra.mrb[0].mxu0 %v1516
        %v1870 = vpop.f32.mrb[0].mxu0
        %v1871 = vadd.f32 %v1373, %v1870
        %v1872 = vpop.f32.mrb[0].mxu0
        %v1873 = vadd.f32 %v1373, %v1872
        %v1874 = vpop.f32.mrb[0].mxu0
        %v1875 = vadd.f32 %v1378, %v1874
        %v1876 = vpop.f32.mrb[0].mxu0
        %v1877 = vadd.f32 %v1378, %v1876
        %1878 = vmatprep.mubr.bf16.mxu0 %v1521
        %1879 = vmatmul.mubr.bf16.gmra.mrb[0].mxu0 %v1520
        %v1880 = vpop.f32.mrb[0].mxu0
        %v1881 = vadd.f32 %v1383, %v1880
        %v1882 = vpop.f32.mrb[0].mxu0
        %v1883 = vadd.f32 %v1383, %v1882
        %v1884 = vpop.f32.mrb[0].mxu0
        %v1885 = vadd.f32 %v1388, %v1884
        %v1886 = vpop.f32.mrb[0].mxu0
        %v1887 = vadd.f32 %v1388, %v1886
        %1888 = vmatprep.mubr.bf16.mxu0 %v1525
        %1889 = vmatmul.mubr.bf16.gmra.mrb[0].mxu0 %v1524
        %v1890 = vpop.f32.mrb[0].mxu0
        %v1891 = vadd.f32 %v1393, %v1890
        %v1892 = vpop.f32.mrb[0].mxu0
        %v1893 = vadd.f32 %v1393, %v1892
        %v1894 = vpop.f32.mrb[0].mxu0
        %v1895 = vadd.f32 %v1398, %v1894
        %v1896 = vpop.f32.mrb[0].mxu0
        %v1897 = vadd.f32 %v1398, %v1896
        %1898 = vdwg.mxu0
        %1899 = vmatprep.subr.bf16.mxu0 %v1243
        %1900 = vmatpush1.bf16.msra.mxu0 %v1242
        %1901 = vmatprep.subr.bf16.mxu0 %v1247
        %1902 = vmatpush1.bf16.msra.mxu0 %v1246
        %1903 = vmatprep.subr.bf16.mxu0 %v1251
        %1904 = vmatpush1.bf16.msra.mxu0 %v1250
        %1905 = vmatprep.subr.bf16.mxu0 %v1255
        %1906 = vmatpush1.bf16.msra.mxu0 %v1254
        %1907 = vmatprep.subr.bf16.mxu0 %v1259
        %1908 = vmatpush1.bf16.msra.mxu0 %v1258
        %1909 = vmatprep.subr.bf16.mxu0 %v1263
        %1910 = vmatpush1.bf16.msra.mxu0 %v1262
        %1911 = vmatprep.subr.bf16.mxu0 %v1267
        %1912 = vmatpush1.bf16.msra.mxu0 %v1266
        %1913 = vmatprep.subr.bf16.mxu0 %v1271
        %1914 = vmatpush1.bf16.msra.mxu0 %v1270
        %1915 = vmatprep.subr.bf16.mxu0 %v1275
        %1916 = vmatpush1.bf16.msra.mxu0 %v1274
        %1917 = vmatprep.subr.bf16.mxu0 %v1279
        %1918 = vmatpush1.bf16.msra.mxu0 %v1278
        %1919 = vmatprep.subr.bf16.mxu0 %v1283
        %1920 = vmatpush1.bf16.msra.mxu0 %v1282
        %1921 = vmatprep.subr.bf16.mxu0 %v1287
        %1922 = vmatpush1.bf16.msra.mxu0 %v1286
        %1923 = vmatprep.subr.bf16.mxu0 %v1291
        %1924 = vmatpush1.bf16.msra.mxu0 %v1290
        %1925 = vmatprep.subr.bf16.mxu0 %v1295
        %1926 = vmatpush1.bf16.msra.mxu0 %v1294
        %1927 = vmatprep.subr.bf16.mxu0 %v1299
        %1928 = vmatpush1.bf16.msra.mxu0 %v1298
        %1929 = vmatprep.subr.bf16.mxu0 %v1303
        %1930 = vmatpush1.bf16.msra.mxu0 %v1302
        %1931 = vmatprep.mubr.bf16.mxu0 %v1499
        %1932 = vmatmul.mubr.bf16.gmra.mrb[0].mxu0 %v1498
        %v1933 = vpop.f32.mrb[0].mxu0
        %v1934 = vadd.f32 %v1821, %v1933
        %v1935 = vpop.f32.mrb[0].mxu0
        %v1936 = vadd.f32 %v1823, %v1935
        %v1937 = vpop.f32.mrb[0].mxu0
        %v1938 = vadd.f32 %v1825, %v1937
        %v1939 = vpop.f32.mrb[0].mxu0
        %v1940 = vadd.f32 %v1827, %v1939
        %1941 = vmatprep.mubr.bf16.mxu0 %v1503
        %1942 = vmatmul.mubr.bf16.gmra.mrb[0].mxu0 %v1502
        %v1943 = vpop.f32.mrb[0].mxu0
        %v1944 = vadd.f32 %v1831, %v1943
        %v1945 = vpop.f32.mrb[0].mxu0
        %v1946 = vadd.f32 %v1833, %v1945
        %v1947 = vpop.f32.mrb[0].mxu0
        %v1948 = vadd.f32 %v1835, %v1947
        %v1949 = vpop.f32.mrb[0].mxu0
        %v1950 = vadd.f32 %v1837, %v1949
        %1951 = vmatprep.mubr.bf16.mxu0 %v1507
        %1952 = vmatmul.mubr.bf16.gmra.mrb[0].mxu0 %v1506
        %v1953 = vpop.f32.mrb[0].mxu0
        %v1954 = vadd.f32 %v1841, %v1953
        %v1955 = vpop.f32.mrb[0].mxu0
        %v1956 = vadd.f32 %v1843, %v1955
        %v1957 = vpop.f32.mrb[0].mxu0
        %v1958 = vadd.f32 %v1845, %v1957
        %v1959 = vpop.f32.mrb[0].mxu0
        %v1960 = vadd.f32 %v1847, %v1959
        %1961 = vmatprep.mubr.bf16.mxu0 %v1511
        %1962 = vmatmul.mubr.bf16.gmra.mrb[0].mxu0 %v1510
        %v1963 = vpop.f32.mrb[0].mxu0
        %v1964 = vadd.f32 %v1851, %v1963
        %v1965 = vpop.f32.mrb[0].mxu0
        %v1966 = vadd.f32 %v1853, %v1965
        %v1967 = vpop.f32.mrb[0].mxu0
        %v1968 = vadd.f32 %v1855, %v1967
        %v1969 = vpop.f32.mrb[0].mxu0
        %v1970 = vadd.f32 %v1857, %v1969
        %1971 = vmatprep.mubr.bf16.mxu0 %v1515
        %1972 = vmatmul.mubr.bf16.gmra.mrb[0].mxu0 %v1514
        %v1973 = vpop.f32.mrb[0].mxu0
        %v1974 = vadd.f32 %v1861, %v1973
        %v1975 = vpop.f32.mrb[0].mxu0
        %v1976 = vadd.f32 %v1863, %v1975
        %v1977 = vpop.f32.mrb[0].mxu0
        %v1978 = vadd.f32 %v1865, %v1977
        %v1979 = vpop.f32.mrb[0].mxu0
        %v1980 = vadd.f32 %v1867, %v1979
        %1981 = vmatprep.mubr.bf16.mxu0 %v1519
        %1982 = vmatmul.mubr.bf16.gmra.mrb[0].mxu0 %v1518
        %v1983 = vpop.f32.mrb[0].mxu0
        %v1984 = vadd.f32 %v1871, %v1983
        %v1985 = vpop.f32.mrb[0].mxu0
        %v1986 = vadd.f32 %v1873, %v1985
        %v1987 = vpop.f32.mrb[0].mxu0
        %v1988 = vadd.f32 %v1875, %v1987
        %v1989 = vpop.f32.mrb[0].mxu0
        %v1990 = vadd.f32 %v1877, %v1989
        %1991 = vmatprep.mubr.bf16.mxu0 %v1523
        %1992 = vmatmul.mubr.bf16.gmra.mrb[0].mxu0 %v1522
        %v1993 = vpop.f32.mrb[0].mxu0
        %v1994 = vadd.f32 %v1881, %v1993
        %v1995 = vpop.f32.mrb[0].mxu0
        %v1996 = vadd.f32 %v1883, %v1995
        %v1997 = vpop.f32.mrb[0].mxu0
        %v1998 = vadd.f32 %v1885, %v1997
        %v1999 = vpop.f32.mrb[0].mxu0
        %v2000 = vadd.f32 %v1887, %v1999
        %2001 = vmatprep.mubr.bf16.mxu0 %v1527
        %2002 = vmatmul.mubr.bf16.gmra.mrb[0].mxu0 %v1526
        %v2003 = vpop.f32.mrb[0].mxu0
        %v2004 = vadd.f32 %v1891, %v2003
        %v2005 = vpop.f32.mrb[0].mxu0
        %v2006 = vadd.f32 %v1893, %v2005
        %v2007 = vpop.f32.mrb[0].mxu0
        %v2008 = vadd.f32 %v1895, %v2007
        %v2009 = vpop.f32.mrb[0].mxu0
        %v2010 = vadd.f32 %v1897, %v2009
        %2011 = vdwg.mxu0
        %v2012 = vmax.f32 %v1708, 0.0
        %v2013 = vmax.f32 %v1710, 0.0
        %v2014 = vmax.f32 %v1934, 0.0
        %v2015 = vmax.f32 %v1936, 0.0
        %v2016 = vmax.f32 %v1712, 0.0
        %v2017 = vmax.f32 %v1714, 0.0
        %v2018 = vmax.f32 %v1938, 0.0
        %v2019 = vmax.f32 %v1940, 0.0
        %v2020 = vmax.f32 %v1718, 0.0
        %v2021 = vmax.f32 %v1720, 0.0
        %v2022 = vmax.f32 %v1944, 0.0
        %v2023 = vmax.f32 %v1946, 0.0
        %v2024 = vmax.f32 %v1722, 0.0
        %v2025 = vmax.f32 %v1724, 0.0
        %v2026 = vmax.f32 %v1948, 0.0
        %v2027 = vmax.f32 %v1950, 0.0
        %v2028 = vmax.f32 %v1728, 0.0
        %v2029 = vmax.f32 %v1730, 0.0
        %v2030 = vmax.f32 %v1954, 0.0
        %v2031 = vmax.f32 %v1956, 0.0
        %v2032 = vmax.f32 %v1732, 0.0
        %v2033 = vmax.f32 %v1734, 0.0
        %v2034 = vmax.f32 %v1958, 0.0
        %v2035 = vmax.f32 %v1960, 0.0
        %v2036 = vmax.f32 %v1738, 0.0
        %v2037 = vmax.f32 %v1740, 0.0
        %v2038 = vmax.f32 %v1964, 0.0
        %v2039 = vmax.f32 %v1966, 0.0
        %v2040 = vmax.f32 %v1742, 0.0
        %v2041 = vmax.f32 %v1744, 0.0
        %v2042 = vmax.f32 %v1968, 0.0
        %v2043 = vmax.f32 %v1970, 0.0
        %v2044 = vmax.f32 %v1748, 0.0
        %v2045 = vmax.f32 %v1750, 0.0
        %v2046 = vmax.f32 %v1974, 0.0
        %v2047 = vmax.f32 %v1976, 0.0
        %v2048 = vmax.f32 %v1752, 0.0
        %v2049 = vmax.f32 %v1754, 0.0
        %v2050 = vmax.f32 %v1978, 0.0
        %v2051 = vmax.f32 %v1980, 0.0
        %v2052 = vmax.f32 %v1758, 0.0
        %v2053 = vmax.f32 %v1760, 0.0
        %v2054 = vmax.f32 %v1984, 0.0
        %v2055 = vmax.f32 %v1986, 0.0
        %v2056 = vmax.f32 %v1762, 0.0
        %v2057 = vmax.f32 %v1764, 0.0
        %v2058 = vmax.f32 %v1988, 0.0
        %v2059 = vmax.f32 %v1990, 0.0
        %v2060 = vmax.f32 %v1768, 0.0
        %v2061 = vmax.f32 %v1770, 0.0
        %v2062 = vmax.f32 %v1994, 0.0
        %v2063 = vmax.f32 %v1996, 0.0
        %v2064 = vmax.f32 %v1772, 0.0
        %v2065 = vmax.f32 %v1774, 0.0
        %v2066 = vmax.f32 %v1998, 0.0
        %v2067 = vmax.f32 %v2000, 0.0
        %v2068 = vmax.f32 %v1778, 0.0
        %v2069 = vmax.f32 %v1780, 0.0
        %v2070 = vmax.f32 %v2004, 0.0
        %v2071 = vmax.f32 %v2006, 0.0
        %v2072 = vmax.f32 %v1782, 0.0
        %v2073 = vmax.f32 %v1784, 0.0
        %v2074 = vmax.f32 %v2008, 0.0
        %v2075 = vmax.f32 %v2010, 0.0
        %v2076 = vld [vmem:[%s5] sm:$0xf]
        %v2078 = vlaneseq
        %v2079 = vshrl.u32 %v2078, 7
        %v2080 = vsub.s32 0, %v2079
        %v2081 = vrot.slane %v2076, %v2080
        %v2082 = vlaneseq
        %v2083 = vshrl.u32 %v2082, 7
        %v2084 = vsub.s32 1, %v2083
        %v2085 = vrot.slane %v2076, %v2084
        %v2086 = vlaneseq
        %v2087 = vshrl.u32 %v2086, 7
        %v2088 = vsub.s32 2, %v2087
        %v2089 = vrot.slane %v2076, %v2088
        %v2090 = vlaneseq
        %v2091 = vshrl.u32 %v2090, 7
        %v2092 = vsub.s32 3, %v2091
        %v2093 = vrot.slane %v2076, %v2092
        %v2098 = vmul.f32 %v2012, %v2081
        %v2099 = vmul.f32 %v2013, %v2085
        %v2100 = vmul.f32 %v2014, %v2089
        %v2101 = vmul.f32 %v2015, %v2093
        %v2102 = vmul.f32 %v2016, %v2081
        %v2103 = vmul.f32 %v2017, %v2085
        %v2104 = vmul.f32 %v2018, %v2089
        %v2105 = vmul.f32 %v2019, %v2093
        %v2106 = vmul.f32 %v2020, %v2081
        %v2107 = vmul.f32 %v2021, %v2085
        %v2108 = vmul.f32 %v2022, %v2089
        %v2109 = vmul.f32 %v2023, %v2093
        %v2110 = vmul.f32 %v2024, %v2081
        %v2111 = vmul.f32 %v2025, %v2085
        %v2112 = vmul.f32 %v2026, %v2089
        %v2113 = vmul.f32 %v2027, %v2093
        %v2114 = vmul.f32 %v2028, %v2081
        %v2115 = vmul.f32 %v2029, %v2085
        %v2116 = vmul.f32 %v2030, %v2089
        %v2117 = vmul.f32 %v2031, %v2093
        %v2118 = vmul.f32 %v2032, %v2081
        %v2119 = vmul.f32 %v2033, %v2085
        %v2120 = vmul.f32 %v2034, %v2089
        %v2121 = vmul.f32 %v2035, %v2093
        %v2122 = vmul.f32 %v2036, %v2081
        %v2123 = vmul.f32 %v2037, %v2085
        %v2124 = vmul.f32 %v2038, %v2089
        %v2125 = vmul.f32 %v2039, %v2093
        %v2126 = vmul.f32 %v2040, %v2081
        %v2127 = vmul.f32 %v2041, %v2085
        %v2128 = vmul.f32 %v2042, %v2089
        %v2129 = vmul.f32 %v2043, %v2093
        %v2130 = vmul.f32 %v2044, %v2081
        %v2131 = vmul.f32 %v2045, %v2085
        %v2132 = vmul.f32 %v2046, %v2089
        %v2133 = vmul.f32 %v2047, %v2093
        %v2134 = vmul.f32 %v2048, %v2081
        %v2135 = vmul.f32 %v2049, %v2085
        %v2136 = vmul.f32 %v2050, %v2089
        %v2137 = vmul.f32 %v2051, %v2093
        %v2138 = vmul.f32 %v2052, %v2081
        %v2139 = vmul.f32 %v2053, %v2085
        %v2140 = vmul.f32 %v2054, %v2089
        %v2141 = vmul.f32 %v2055, %v2093
        %v2142 = vmul.f32 %v2056, %v2081
        %v2143 = vmul.f32 %v2057, %v2085
        %v2144 = vmul.f32 %v2058, %v2089
        %v2145 = vmul.f32 %v2059, %v2093
        %v2146 = vmul.f32 %v2060, %v2081
        %v2147 = vmul.f32 %v2061, %v2085
        %v2148 = vmul.f32 %v2062, %v2089
        %v2149 = vmul.f32 %v2063, %v2093
        %v2150 = vmul.f32 %v2064, %v2081
        %v2151 = vmul.f32 %v2065, %v2085
        %v2152 = vmul.f32 %v2066, %v2089
        %v2153 = vmul.f32 %v2067, %v2093
        %v2154 = vmul.f32 %v2068, %v2081
        %v2155 = vmul.f32 %v2069, %v2085
        %v2156 = vmul.f32 %v2070, %v2089
        %v2157 = vmul.f32 %v2071, %v2093
        %v2158 = vmul.f32 %v2072, %v2081
        %v2159 = vmul.f32 %v2073, %v2085
        %v2160 = vmul.f32 %v2074, %v2089
        %v2161 = vmul.f32 %v2075, %v2093
        %v2162 = vadd.f32 %v2098, %v2099
        %v2163 = vadd.f32 %v2162, %v2100
        %v2164 = vadd.f32 %v2163, %v2101
        %2165 = vadd.xlane.f32.xlu0 %v2164
        %v2166 = vpop.xlane.xlu0 %2165
        %v2167 = vadd.f32 %v2102, %v2103
        %v2168 = vadd.f32 %v2167, %v2104
        %v2169 = vadd.f32 %v2168, %v2105
        %2170 = vadd.xlane.f32.xlu0 %v2169
        %v2171 = vpop.xlane.xlu0 %2170
        %v2172 = vadd.f32 %v2106, %v2107
        %v2173 = vadd.f32 %v2172, %v2108
        %v2174 = vadd.f32 %v2173, %v2109
        %2175 = vadd.xlane.f32.xlu0 %v2174
        %v2176 = vpop.xlane.xlu0 %2175
        %v2177 = vadd.f32 %v2110, %v2111
        %v2178 = vadd.f32 %v2177, %v2112
        %v2179 = vadd.f32 %v2178, %v2113
        %2180 = vadd.xlane.f32.xlu0 %v2179
        %v2181 = vpop.xlane.xlu0 %2180
        %v2182 = vadd.f32 %v2114, %v2115
        %v2183 = vadd.f32 %v2182, %v2116
        %v2184 = vadd.f32 %v2183, %v2117
        %2185 = vadd.xlane.f32.xlu0 %v2184
        %v2186 = vpop.xlane.xlu0 %2185
        %v2187 = vadd.f32 %v2118, %v2119
        %v2188 = vadd.f32 %v2187, %v2120
        %v2189 = vadd.f32 %v2188, %v2121
        %2190 = vadd.xlane.f32.xlu0 %v2189
        %v2191 = vpop.xlane.xlu0 %2190
        %v2192 = vadd.f32 %v2122, %v2123
        %v2193 = vadd.f32 %v2192, %v2124
        %v2194 = vadd.f32 %v2193, %v2125
        %2195 = vadd.xlane.f32.xlu0 %v2194
        %v2196 = vpop.xlane.xlu0 %2195
        %v2197 = vadd.f32 %v2126, %v2127
        %v2198 = vadd.f32 %v2197, %v2128
        %v2199 = vadd.f32 %v2198, %v2129
        %2200 = vadd.xlane.f32.xlu0 %v2199
        %v2201 = vpop.xlane.xlu0 %2200
        %v2202 = vadd.f32 %v2130, %v2131
        %v2203 = vadd.f32 %v2202, %v2132
        %v2204 = vadd.f32 %v2203, %v2133
        %2205 = vadd.xlane.f32.xlu0 %v2204
        %v2206 = vpop.xlane.xlu0 %2205
        %v2207 = vadd.f32 %v2134, %v2135
        %v2208 = vadd.f32 %v2207, %v2136
        %v2209 = vadd.f32 %v2208, %v2137
        %2210 = vadd.xlane.f32.xlu0 %v2209
        %v2211 = vpop.xlane.xlu0 %2210
        %v2212 = vadd.f32 %v2138, %v2139
        %v2213 = vadd.f32 %v2212, %v2140
        %v2214 = vadd.f32 %v2213, %v2141
        %2215 = vadd.xlane.f32.xlu0 %v2214
        %v2216 = vpop.xlane.xlu0 %2215
        %v2217 = vadd.f32 %v2142, %v2143
        %v2218 = vadd.f32 %v2217, %v2144
        %v2219 = vadd.f32 %v2218, %v2145
        %2220 = vadd.xlane.f32.xlu0 %v2219
        %v2221 = vpop.xlane.xlu0 %2220
        %v2222 = vadd.f32 %v2146, %v2147
        %v2223 = vadd.f32 %v2222, %v2148
        %v2224 = vadd.f32 %v2223, %v2149
        %2225 = vadd.xlane.f32.xlu0 %v2224
        %v2226 = vpop.xlane.xlu0 %2225
        %v2227 = vadd.f32 %v2150, %v2151
        %v2228 = vadd.f32 %v2227, %v2152
        %v2229 = vadd.f32 %v2228, %v2153
        %2230 = vadd.xlane.f32.xlu0 %v2229
        %v2231 = vpop.xlane.xlu0 %2230
        %v2232 = vadd.f32 %v2154, %v2155
        %v2233 = vadd.f32 %v2232, %v2156
        %v2234 = vadd.f32 %v2233, %v2157
        %2235 = vadd.xlane.f32.xlu0 %v2234
        %v2236 = vpop.xlane.xlu0 %2235
        %v2237 = vadd.f32 %v2158, %v2159
        %v2238 = vadd.f32 %v2237, %v2160
        %v2239 = vadd.f32 %v2238, %v2161
        %2240 = vadd.xlane.f32.xlu0 %v2239
        %v2241 = vpop.xlane.xlu0 %2240
        %vm2242 = vcmask 7168
        %2243 = vst.msk [vmem:[%s269] sm:$0xff] %vm2242, %v2166
        %2244 = vst.msk [vmem:[%s269 + $0x8] sm:$0xff] %vm2242, %v2171
        %2245 = vst.msk [vmem:[%s269 + $0x10] sm:$0xff] %vm2242, %v2176
        %2246 = vst.msk [vmem:[%s269 + $0x18] sm:$0xff] %vm2242, %v2181
        %2247 = vst.msk [vmem:[%s269 + $0x20] sm:$0xff] %vm2242, %v2186
        %2248 = vst.msk [vmem:[%s269 + $0x28] sm:$0xff] %vm2242, %v2191
        %2249 = vst.msk [vmem:[%s269 + $0x30] sm:$0xff] %vm2242, %v2196
        %2250 = vst.msk [vmem:[%s269 + $0x38] sm:$0xff] %vm2242, %v2201
        %2251 = vst.msk [vmem:[%s269 + $0x40] sm:$0xff] %vm2242, %v2206
        %2252 = vst.msk [vmem:[%s269 + $0x48] sm:$0xff] %vm2242, %v2211
        %2253 = vst.msk [vmem:[%s269 + $0x50] sm:$0xff] %vm2242, %v2216
        %2254 = vst.msk [vmem:[%s269 + $0x58] sm:$0xff] %vm2242, %v2221
        %2255 = vst.msk [vmem:[%s269 + $0x60] sm:$0xff] %vm2242, %v2226
        %2256 = vst.msk [vmem:[%s269 + $0x68] sm:$0xff] %vm2242, %v2231
        %2257 = vst.msk [vmem:[%s269 + $0x70] sm:$0xff] %vm2242, %v2236
        %2258 = vst.msk [vmem:[%s269 + $0x78] sm:$0xff] %vm2242, %v2241
        %p2259 = scmp.lt.s32.totalorder %s20, 1
        %s2260 = scalar_select %p2259, %s20, 1
        %s2261 = smul.addr %s2260, 16
        %s2262 = smul.addr %s2261, 8
        %s2263 = scalar_lea.vmem %s6, %s2262
        // Predicated region
        $region49: #{tpu_custom_call.1} parent=43 // pred_check
          %p2264 = pneg %p169
        $region50: #{tpu_custom_call.1} parent=43 // pred_check_branch
          %2266 = sbr.rel (%p2264) target = $region52
        $region51: #{tpu_custom_call.1} parent=43 // pred_region
          _
        $region52: #{tpu_custom_call.1} parent=43 // pred_fallthru
          _
      $region44: #{tpu_custom_call.1} parent=5 // pred_fallthru
        _
      %p2267 = scmp.le.s32.totalorder 2, %s15
      // Predicated region
      $region53: #{tpu_custom_call.1} parent=5 // pred_check
        %p2268 = pneg %p2267
      $region54: #{tpu_custom_call.1} parent=5 // pred_check_branch
        %2270 = sbr.rel (%p2268) target = $region56
      $region55: #{tpu_custom_call.1} parent=5 // pred_region
        %s2271 = ssub.s32 %s15, 2
        // Predicated region
        $region57: #{tpu_custom_call.1} parent=55 // pred_check
          %p2272 = pneg %p175
        $region58: #{tpu_custom_call.1} parent=55 // pred_check_branch
          %2274 = sbr.rel (%p2272) target = $region60
        $region59: #{tpu_custom_call.1} parent=55 // pred_region
          %p2275 = scmp.lt.s32.totalorder %s21, 1
          %s2276 = scalar_select %p2275, %s21, 1
          %s2277 = smul.addr %s2276, 16
          %s2278 = smul.addr %s2277, 8
          %s2279 = scalar_lea.vmem %s6, %s2278
        $region60: #{tpu_custom_call.1} parent=55 // pred_fallthru
          _
      $region56: #{tpu_custom_call.1} parent=5 // pred_fallthru
        _
    $region6: #{tpu_custom_call.1} parent=1 // loop_footer
      %s19 = sadd.s32 1, %s15
    $region7: #{tpu_custom_call.1} parent=1 // loop_footer_branch
      %14 = sbr.rel target = $region3
    $region8: #{tpu_custom_call.1} parent=1 // loop_exit
      _
    %2280 = vsyncpa [#allocation4], 1
    %s2281 = scalar_lea.sflag [#allocation4], 1
    %2282 = vsyncpa %s2281, 1

</llo_original>
